<compile_context>
chip_gen: v6e
topology: v6e:2x2x1
jax: 0.10.0
libtpu: 0.0.40
codegen_flags: <defaults>
</compile_context>

<pallas_src>
import functools

import jax
import jax.numpy as jnp
import numpy as np
from jax.experimental import pallas as pl
from jax.experimental.pallas import tpu as pltpu  # noqa: F401


# ----------------------------- fused Pallas kernel -----------------------------

def _fused_gat_kernel(combined_ref, wslab_ref, vslab_ref, mask_ref,
                      maskslab_ref, g_ref, hmk_ref, hmv_ref, o_ref,
                      *, num_heads, num_layers, dim, in_dim):
    D = dim
    H = num_heads
    L = num_layers

    mask = mask_ref[...]          # [M, 1] f32 token mask (1 = valid token)
    valid = maskslab_ref[0]       # [M, H*M] f32 key-side validity, head-tiled
    g = g_ref[...]                # [H*M, H*N] bf16 block-diag grouping matrix
    hmk = hmk_ref[...]            # [D, H*M] f32 head row-mask for block-diag K^T
    hmv = hmv_ref[...]            # [H*M, D] f32 head col-mask for block-diag V
    vs = vslab_ref[...]           # [1+4L, 3D] f32 packed biases / LN params

    # Input projection: concat(node_feat, speaker_emb) @ W_cp + b_cp  (f32 acc)
    w_cp = wslab_ref[0:in_dim, 0:D]                               # bf16
    b_cp = vs[0:1, 0:D]
    x = jnp.dot(combined_ref[...], w_cp,
                preferred_element_type=jnp.float32) + b_cp        # [M, D] f32

    for li in range(L):
        base = in_dim + li * 2 * D
        wqkv = wslab_ref[base:base + D, :]                        # [D, 3D] bf16
        wo = wslab_ref[base + D:base + 2 * D, 0:D]                # [D, D]  bf16
        bqkv = vs[1 + li:2 + li, :]                               # [1, 3D]
        lng = vs[1 + L + li:2 + L + li, 0:D]                      # [1, D]
        lnb = vs[1 + 2 * L + li:2 + 2 * L + li, 0:D]              # [1, D]
        bo = vs[1 + 3 * L + li:2 + 3 * L + li, 0:D]               # [1, D]
        addm = maskslab_ref[1 + li]                               # [M, H*M] f32

        # ----- LayerNorm (f32 elementwise) -----
        mu = jnp.mean(x, axis=-1, keepdims=True)
        xc = x - mu
        var = jnp.mean(xc * xc, axis=-1, keepdims=True)
        nx = xc * jax.lax.rsqrt(var + 1e-5) * lng + lnb

        # ----- fused Q|K|V projection (Q pre-scaled by 1/sqrt(hd) in weights) -----
        qkv = jnp.dot(nx.astype(jnp.bfloat16), wqkv,
                      preferred_element_type=jnp.float32) + bqkv  # [M, 3D] f32
        q = qkv[:, 0:D].astype(jnp.bfloat16)
        k = qkv[:, D:2 * D]
        v = qkv[:, 2 * D:3 * D]

        # Block-diagonal K^T [D, H*M] (block h holds K_h^T) -> all-head scores
        # in a single lane-dense MXU op.
        kbd = (jnp.tile(k.T, (1, H)) * hmk).astype(jnp.bfloat16)
        s = jnp.dot(q, kbd, preferred_element_type=jnp.float32)   # [M, H*M]
        z = s + addm
        # Row-global max is a constant shift per key-node segment -> softmax
        # value is unchanged; only risks underflow for huge bias spreads.
        m = jnp.max(z, axis=-1, keepdims=True)
        p = jnp.exp(z - m) * valid                                # [M, H*M] f32

        # Per-(query, head, key-node) softmax denominators via grouping matmul,
        # reciprocal on the EUP, expanded back with one more matmul.
        segd = jnp.dot(p.astype(jnp.bfloat16), g,
                       preferred_element_type=jnp.float32)        # [M, H*N]
        rseg = pl.reciprocal(jnp.maximum(segd, 1e-30), approx=True)
        rflat = jax.lax.dot_general(rseg.astype(jnp.bfloat16), g,
                                    (((1,), (1,)), ((), ())),
                                    preferred_element_type=jnp.float32)
        pn = (p * rflat).astype(jnp.bfloat16)                     # [M, H*M]

        # Block-diagonal V [H*M, D]: one matmul gives all heads' outputs already
        # placed in their output columns (no per-head o_proj accumulation).
        vbd = (jnp.tile(v, (H, 1)) * hmv).astype(jnp.bfloat16)
        feat = jnp.dot(pn, vbd, preferred_element_type=jnp.float32)  # [M, D]

        # o_proj + bias + residual + token mask
        y = jnp.dot(feat.astype(jnp.bfloat16), wo,
                    preferred_element_type=jnp.float32) + bo + x
        x = y * mask
        if li < L - 1:
            x = jnp.where(x > 0.0, x, jnp.exp(x) - 1.0)   # ELU; dropout = identity

    o_ref[...] = x.astype(o_ref.dtype)


# ------------------------------ model glue ------------------------------

def build_edge_bias(N, src, dst, edge_type, edge_type_weights):
    if edge_type is None:
        vals = jnp.ones_like(src, dtype=jnp.float32)
    else:
        w = jax.nn.softplus(edge_type_weights)
        vals = jnp.clip(w[edge_type - 1], 1e-6, 1e6)
    return jnp.zeros((N, N), jnp.float32).at[src, dst].set(vals)


def gat_network_forward(params, node_features, node_masks, speaker_ids,
                        edge_index, edge_type, num_heads, num_layers):
    N, S, D = node_features.shape
    M = N * S
    H = num_heads
    L = num_layers
    hd = D // H
    scale = 1.0 / float(np.sqrt(hd))

    # --- glue (gather heavy, tiny): speaker lookup + graph masks ---
    spk = params['speaker_emb'][speaker_ids]                         # [N, E]
    E = spk.shape[-1]
    in_dim = D + E
    combined = jnp.concatenate(
        [node_features, jnp.broadcast_to(spk[:, None, :], (N, S, E))],
        axis=-1).reshape(M, in_dim).astype(jnp.bfloat16)

    src, dst = edge_index[0], edge_index[1]
    edge_exists = jnp.zeros((N, N), jnp.float32).at[src, dst].set(1.0)
    lengths = node_masks.sum(axis=-1)
    kvalid = (jnp.arange(S)[None, :] < lengths[:, None]).astype(jnp.float32)
    ee_rep = jnp.repeat(jnp.repeat(edge_exists, S, axis=0), S, axis=1)  # [M,M]
    valid = ee_rep * kvalid.reshape(1, M)                               # [M,M]

    pages = [jnp.tile(valid, (1, H))]                                   # [M,H*M]
    for li in range(L):
        eb = build_edge_bias(N, src, dst, edge_type,
                             params['layers'][li]['edge_type_weights'])
        eb_rep = jnp.repeat(jnp.repeat(eb, S, axis=0), S, axis=1)
        addm = jnp.where(valid > 0, eb_rep, -1e30)
        pages.append(jnp.tile(addm, (1, H)))
    # TODO(synk): this dense [L+1, M, H*M] slab scales quadratically in M; for
    # large graphs switch to compact [L, N, N] biases expanded in-kernel via the
    # grouping matrix before it outgrows v7x's 64 MiB VMEM.
    maskslab = jnp.stack(pages)                                         # [L+1,M,H*M]

    # structural head-block-diagonal constants (built host-side with numpy)
    g_np = np.zeros((H * M, H * N), np.float32)
    hmk_np = np.zeros((D, H * M), np.float32)
    hmv_np = np.zeros((H * M, D), np.float32)
    for h in range(H):
        for n in range(N):
            g_np[h * M + n * S:h * M + (n + 1) * S, h * N + n] = 1.0
        hmk_np[h * hd:(h + 1) * hd, h * M:(h + 1) * M] = 1.0
        hmv_np[h * M:(h + 1) * M, h * hd:(h + 1) * hd] = 1.0
    g_mat = jnp.asarray(g_np, jnp.bfloat16)
    hmk = jnp.asarray(hmk_np, jnp.float32)
    hmv = jnp.asarray(hmv_np, jnp.float32)

    # --- pack weights / biases into two slabs (fewer DMAs) ---
    layers = params['layers']
    w_rows = [jnp.pad(params['w_cp'], ((0, 0), (0, 2 * D)))]            # [in_dim,3D]
    v_rows = [jnp.pad(params['b_cp'].reshape(1, D), ((0, 0), (0, 2 * D)))]
    for li in range(L):
        p = layers[li]
        w_rows.append(jnp.concatenate([p['wq'] * scale, p['wk'], p['wv']], axis=1))
        w_rows.append(jnp.pad(p['wo'], ((0, 0), (0, 2 * D))))
        v_rows.append(jnp.concatenate([p['bq'] * scale, p['bk'], p['bv']]
                                      ).reshape(1, 3 * D))
    for key in ('ln_g', 'ln_b', 'bo'):
        for li in range(L):
            v_rows.append(jnp.pad(layers[li][key].reshape(1, D),
                                  ((0, 0), (0, 2 * D))))
    wslab = jnp.concatenate(w_rows, axis=0).astype(jnp.bfloat16)        # [in+2LD,3D]
    vslab = jnp.concatenate(v_rows, axis=0)                             # [1+4L, 3D]

    mask_col = node_masks.reshape(M, 1).astype(jnp.float32)

    kernel = functools.partial(_fused_gat_kernel, num_heads=H, num_layers=L,
                               dim=D, in_dim=in_dim)
    # TODO(synk): if a batch-of-graphs dimension exists, add a leading
    # "parallel" grid axis so both v7x TensorCores are used; single fused step
    # kept for this single tiny graph.
    out = pl.pallas_call(
        kernel,
        out_shape=jax.ShapeDtypeStruct((M, D), node_features.dtype),
    )(combined, wslab, vslab, mask_col, maskslab, g_mat, hmk, hmv)
    return out.reshape(N, S, D)


def init_params(key, dim, num_heads, speaker_dim, num_speakers, num_layers,
                num_edge_types=4):
    keys = jax.random.split(key, 2 + num_layers)

    def lin(k, din, dout):
        kw, kb = jax.random.split(k)
        w = jax.random.normal(kw, (din, dout), jnp.float32) * (din ** -0.5)
        b = jax.random.normal(kb, (dout,), jnp.float32) * 0.01
        return w, b

    params = {
        'speaker_emb': jax.random.normal(keys[0], (num_speakers, speaker_dim),
                                         jnp.float32),
    }
    params['w_cp'], params['b_cp'] = lin(keys[1], dim + speaker_dim, dim)
    layers = []
    for li in range(num_layers):
        lk = jax.random.split(keys[2 + li], 4)
        lp = {
            'edge_type_weights': jnp.ones((num_edge_types,), jnp.float32),
            'ln_g': jnp.ones((dim,), jnp.float32),
            'ln_b': jnp.zeros((dim,), jnp.float32),
        }
        lp['wq'], lp['bq'] = lin(lk[0], dim, dim)
        lp['wk'], lp['bk'] = lin(lk[1], dim, dim)
        lp['wv'], lp['bv'] = lin(lk[2], dim, dim)
        lp['wo'], lp['bo'] = lin(lk[3], dim, dim)
        layers.append(lp)
    params['layers'] = layers
    return params


# -------------------------- pure-JAX reference --------------------------

def _ref_attention(q4, k4, v4, nm, ee, eb):
    N, H, S, Dh = q4.shape
    scores = jnp.einsum('ihqd,jhkd->ihjqk', q4, k4) / (Dh ** 0.5)
    scores = scores + eb[:, None, :, None, None]
    klen = nm.sum(-1)
    kvalid = jnp.arange(S)[None, :] < klen[:, None]                # [N,S]
    valid = kvalid[None, None, :, None, :] & (ee[:, None, :, None, None] > 0)
    neg = jnp.where(valid, scores, -1e30)
    m = neg.max(-1, keepdims=True)
    p = jnp.exp(neg - m) * valid
    attn = p / jnp.maximum(p.sum(-1, keepdims=True), 1e-30)
    out = jnp.einsum('ihjqk,jhkd->ihqd', attn, v4)
    qvalid = (jnp.arange(S)[None, :] < klen[:, None]).astype(q4.dtype)
    return out * qvalid[:, None, :, None]


def reference_forward(params, nf, nm, sid, edge_index, edge_type, H, L):
    N, S, D = nf.shape
    spk = params['speaker_emb'][sid]
    E = spk.shape[-1]
    combined = jnp.concatenate(
        [nf, jnp.broadcast_to(spk[:, None, :], (N, S, E))], -1)
    x = (combined.reshape(N * S, D + E) @ params['w_cp'] + params['b_cp']
         ).reshape(N, S, D)
    src, dst = edge_index[0], edge_index[1]
    ee = jnp.zeros((N, N), jnp.float32).at[src, dst].set(1.0)
    for li in range(L):
        p = params['layers'][li]
        eb = build_edge_bias(N, src, dst, edge_type, p['edge_type_weights'])
        xf = x.reshape(N * S, D)
        mu = xf.mean(-1, keepdims=True)
        var = ((xf - mu) ** 2).mean(-1, keepdims=True)
        nx = (xf - mu) / jnp.sqrt(var + 1e-5) * p['ln_g'] + p['ln_b']
        q = (nx @ p['wq'] + p['bq']).reshape(N, S, H, D // H).transpose(0, 2, 1, 3)
        k = (nx @ p['wk'] + p['bk']).reshape(N, S, H, D // H).transpose(0, 2, 1, 3)
        v = (nx @ p['wv'] + p['bv']).reshape(N, S, H, D // H).transpose(0, 2, 1, 3)
        a = _ref_attention(q, k, v, nm, ee, eb)
        feat = a.transpose(0, 2, 1, 3).reshape(N * S, D)
        out = (feat @ p['wo'] + p['bo'] + xf) * nm.reshape(N * S, 1)
        x = out.reshape(N, S, D)
        if li < L - 1:
            x = jnp.where(x > 0, x, jnp.exp(x) - 1.0)
    return x * nm[:, :, None]


# --------------------------------- main ---------------------------------

if __name__ == "__main__":
    key = jax.random.PRNGKey(0)
    N, S, D, H, L = 8, 8, 32, 4, 2         # num_nodes, max_seq_len, dim, heads, layers
    num_speakers = 3

    kp, kf = jax.random.split(key)
    params = init_params(kp, D, H, D, num_speakers, L)

    node_features = jax.random.normal(kf, (N, S, D), jnp.float32)
    lengths = jnp.array([8, 5, 3, 8, 1, 6, 8, 4], dtype=jnp.int32)
    node_masks = (jnp.arange(S)[None, :] < lengths[:, None]).astype(jnp.float32)
    speaker_ids = jnp.array([0, 1, 2, 0, 1, 2, 0, 1], dtype=jnp.int32)
    edge_index = jnp.array([[0, 1, 2, 3, 4, 5, 6, 7, 0, 2, 4, 6],
                            [1, 2, 3, 4, 5, 6, 7, 0, 3, 5, 7, 1]], dtype=jnp.int32)
    edge_type = jnp.array([1, 2, 3, 4, 1, 2, 3, 4, 1, 2, 3, 4], dtype=jnp.int32)

    out = gat_network_forward(params, node_features, node_masks, speaker_ids,
                              edge_index, edge_type, H, L)
    out = jax.block_until_ready(out)

    ref = reference_forward(params, node_features, node_masks, speaker_ids,
                            edge_index, edge_type, H, L)
    # Slightly looser tolerance than the pure-f32 variant: MXU operands are
    # bfloat16 (f32 accumulate) per the perf review.
    np.testing.assert_allclose(np.asarray(out), np.asarray(ref),
                               atol=5e-2, rtol=5e-2)
    print("KERNEL_OK")
</pallas_src>

<mosaic_0001>
module attributes {stable_mosaic.version = 11 : i64} {
  func.func @_fused_gat_kernel(%arg0: memref<64x64xbf16, #tpu.memory_space<vmem>>, %arg1: memref<192x96xbf16, #tpu.memory_space<vmem>>, %arg2: memref<9x96xf32, #tpu.memory_space<vmem>>, %arg3: memref<64x1xf32, #tpu.memory_space<vmem>>, %arg4: memref<3x64x256xf32, #tpu.memory_space<vmem>>, %arg5: memref<256x32xbf16, #tpu.memory_space<vmem>>, %arg6: memref<32x256xf32, #tpu.memory_space<vmem>>, %arg7: memref<256x32xf32, #tpu.memory_space<vmem>>, %arg8: memref<64x32xf32, #tpu.memory_space<vmem>>) attributes {dimension_semantics = [], scalar_prefetch = 0 : i64, scratch_operands = 0 : i64, tpu.core_type = #tpu.core_type<tc>} {
    %c0 = arith.constant 0 : index
    %c0_0 = arith.constant 0 : index
    %0 = vector.load %arg3[%c0, %c0_0] : memref<64x1xf32, #tpu.memory_space<vmem>>, vector<64x1xf32>
    %c0_1 = arith.constant 0 : index
    %c0_2 = arith.constant 0 : index
    %c0_3 = arith.constant 0 : index
    %1 = vector.load %arg4[%c0_1, %c0_2, %c0_3] : memref<3x64x256xf32, #tpu.memory_space<vmem>>, vector<1x64x256xf32>
    %2 = vector.shape_cast %1 : vector<1x64x256xf32> to vector<64x256xf32>
    %c0_4 = arith.constant 0 : index
    %c0_5 = arith.constant 0 : index
    %3 = vector.load %arg5[%c0_4, %c0_5] : memref<256x32xbf16, #tpu.memory_space<vmem>>, vector<256x32xbf16>
    %c0_6 = arith.constant 0 : index
    %c0_7 = arith.constant 0 : index
    %4 = vector.load %arg6[%c0_6, %c0_7] : memref<32x256xf32, #tpu.memory_space<vmem>>, vector<32x256xf32>
    %c0_8 = arith.constant 0 : index
    %c0_9 = arith.constant 0 : index
    %5 = vector.load %arg7[%c0_8, %c0_9] : memref<256x32xf32, #tpu.memory_space<vmem>>, vector<256x32xf32>
    %c0_10 = arith.constant 0 : index
    %c0_11 = arith.constant 0 : index
    %6 = vector.load %arg2[%c0_10, %c0_11] : memref<9x96xf32, #tpu.memory_space<vmem>>, vector<9x96xf32>
    %c0_12 = arith.constant 0 : index
    %c0_13 = arith.constant 0 : index
    %7 = vector.load %arg1[%c0_12, %c0_13] : memref<192x96xbf16, #tpu.memory_space<vmem>>, vector<64x32xbf16>
    %8 = vector.extract_strided_slice %6 {offsets = [0, 0], sizes = [1, 32], strides = [1, 1]} : vector<9x96xf32> to vector<1x32xf32>
    %c0_14 = arith.constant 0 : index
    %c0_15 = arith.constant 0 : index
    %9 = vector.load %arg0[%c0_14, %c0_15] : memref<64x64xbf16, #tpu.memory_space<vmem>>, vector<64x64xbf16>
    %cst = arith.constant dense<0.000000e+00> : vector<64x32xf32>
    %10 = tpu.matmul %9, %7, %cst {dimension_numbers = #tpu.dot_dimension_numbers<[1], [0], [0], [1], [0, 0, 1, 1], [], []>} : vector<64x64xbf16>, vector<64x32xbf16>, vector<64x32xf32> -> vector<64x32xf32>
    %11 = vector.broadcast %8 : vector<1x32xf32> to vector<64x32xf32>
    %12 = arith.addf %10, %11 : vector<64x32xf32>
    %c64 = arith.constant 64 : index
    %c0_16 = arith.constant 0 : index
    %13 = vector.load %arg1[%c64, %c0_16] : memref<192x96xbf16, #tpu.memory_space<vmem>>, vector<32x96xbf16>
    %c96 = arith.constant 96 : index
    %c0_17 = arith.constant 0 : index
    %14 = vector.load %arg1[%c96, %c0_17] : memref<192x96xbf16, #tpu.memory_space<vmem>>, vector<32x32xbf16>
    %15 = vector.extract_strided_slice %6 {offsets = [1, 0], sizes = [1, 96], strides = [1, 1]} : vector<9x96xf32> to vector<1x96xf32>
    %16 = vector.extract_strided_slice %6 {offsets = [3, 0], sizes = [1, 32], strides = [1, 1]} : vector<9x96xf32> to vector<1x32xf32>
    %17 = vector.extract_strided_slice %6 {offsets = [5, 0], sizes = [1, 32], strides = [1, 1]} : vector<9x96xf32> to vector<1x32xf32>
    %18 = vector.extract_strided_slice %6 {offsets = [7, 0], sizes = [1, 32], strides = [1, 1]} : vector<9x96xf32> to vector<1x32xf32>
    %c1 = arith.constant 1 : index
    %c0_18 = arith.constant 0 : index
    %c0_19 = arith.constant 0 : index
    %19 = vector.load %arg4[%c1, %c0_18, %c0_19] : memref<3x64x256xf32, #tpu.memory_space<vmem>>, vector<1x64x256xf32>
    %20 = vector.shape_cast %19 : vector<1x64x256xf32> to vector<64x256xf32>
    %cst_20 = arith.constant dense<0.000000e+00> : vector<64xf32>
    %21 = vector.multi_reduction <add>, %12, %cst_20 [1] : vector<64x32xf32> to vector<64xf32>
    %22 = vector.shape_cast %21 : vector<64xf32> to vector<64x1xf32>
    %cst_21 = arith.constant 3.200000e+01 : f32
    %23 = vector.broadcast %cst_21 : f32 to vector<64x1xf32>
    %24 = arith.divf %22, %23 : vector<64x1xf32>
    %25 = vector.broadcast %24 : vector<64x1xf32> to vector<64x32xf32>
    %26 = arith.subf %12, %25 : vector<64x32xf32>
    %27 = arith.mulf %26, %26 : vector<64x32xf32>
    %cst_22 = arith.constant dense<0.000000e+00> : vector<64xf32>
    %28 = vector.multi_reduction <add>, %27, %cst_22 [1] : vector<64x32xf32> to vector<64xf32>
    %29 = vector.shape_cast %28 : vector<64xf32> to vector<64x1xf32>
    %cst_23 = arith.constant 3.200000e+01 : f32
    %30 = vector.broadcast %cst_23 : f32 to vector<64x1xf32>
    %31 = arith.divf %29, %30 : vector<64x1xf32>
    %cst_24 = arith.constant 9.99999974E-6 : f32
    %32 = vector.broadcast %cst_24 : f32 to vector<64x1xf32>
    %33 = arith.addf %31, %32 : vector<64x1xf32>
    %34 = math.rsqrt %33 : vector<64x1xf32>
    %35 = vector.broadcast %34 : vector<64x1xf32> to vector<64x32xf32>
    %36 = arith.mulf %26, %35 : vector<64x32xf32>
    %37 = vector.broadcast %16 : vector<1x32xf32> to vector<64x32xf32>
    %38 = arith.mulf %36, %37 : vector<64x32xf32>
    %39 = vector.broadcast %17 : vector<1x32xf32> to vector<64x32xf32>
    %40 = arith.addf %38, %39 : vector<64x32xf32>
    %41 = arith.truncf %40 : vector<64x32xf32> to vector<64x32xbf16>
    %cst_25 = arith.constant dense<0.000000e+00> : vector<64x96xf32>
    %42 = tpu.matmul %41, %13, %cst_25 {dimension_numbers = #tpu.dot_dimension_numbers<[1], [0], [0], [1], [0, 0, 1, 1], [], []>} : vector<64x32xbf16>, vector<32x96xbf16>, vector<64x96xf32> -> vector<64x96xf32>
    %43 = vector.broadcast %15 : vector<1x96xf32> to vector<64x96xf32>
    %44 = arith.addf %42, %43 : vector<64x96xf32>
    %45 = vector.extract_strided_slice %44 {offsets = [0, 0], sizes = [64, 32], strides = [1, 1]} : vector<64x96xf32> to vector<64x32xf32>
    %46 = arith.truncf %45 : vector<64x32xf32> to vector<64x32xbf16>
    %47 = vector.extract_strided_slice %44 {offsets = [0, 32], sizes = [64, 32], strides = [1, 1]} : vector<64x96xf32> to vector<64x32xf32>
    %48 = vector.extract_strided_slice %44 {offsets = [0, 64], sizes = [64, 32], strides = [1, 1]} : vector<64x96xf32> to vector<64x32xf32>
    %49 = tpu.transpose %47, [1, 0] : vector<64x32xf32> -> vector<32x64xf32>
    %50 = tpu.concatenate %49, %49, %49, %49 in 1 : vector<32x64xf32>, vector<32x64xf32>, vector<32x64xf32>, vector<32x64xf32> -> vector<32x256xf32>
    %51 = arith.mulf %50, %4 : vector<32x256xf32>
    %52 = arith.truncf %51 : vector<32x256xf32> to vector<32x256xbf16>
    %cst_26 = arith.constant dense<0.000000e+00> : vector<64x256xf32>
    %53 = tpu.matmul %46, %52, %cst_26 {dimension_numbers = #tpu.dot_dimension_numbers<[1], [0], [0], [1], [0, 0, 1, 1], [], []>} : vector<64x32xbf16>, vector<32x256xbf16>, vector<64x256xf32> -> vector<64x256xf32>
    %54 = arith.addf %53, %20 : vector<64x256xf32>
    %cst_27 = arith.constant dense<0xFF800000> : vector<64xf32>
    %55 = vector.multi_reduction <maximumf>, %54, %cst_27 [1] : vector<64x256xf32> to vector<64xf32>
    %56 = vector.shape_cast %55 : vector<64xf32> to vector<64x1xf32>
    %57 = vector.broadcast %56 : vector<64x1xf32> to vector<64x256xf32>
    %58 = arith.subf %54, %57 : vector<64x256xf32>
    %59 = math.exp %58 : vector<64x256xf32>
    %60 = arith.mulf %59, %2 : vector<64x256xf32>
    %61 = arith.truncf %60 : vector<64x256xf32> to vector<64x256xbf16>
    %cst_28 = arith.constant dense<0.000000e+00> : vector<64x32xf32>
    %62 = tpu.matmul %61, %3, %cst_28 {dimension_numbers = #tpu.dot_dimension_numbers<[1], [0], [0], [1], [0, 0, 1, 1], [], []>} : vector<64x256xbf16>, vector<256x32xbf16>, vector<64x32xf32> -> vector<64x32xf32>
    %cst_29 = arith.constant 1.000000e-30 : f32
    %63 = vector.broadcast %cst_29 : f32 to vector<64x32xf32>
    %64 = arith.maximumf %62, %63 : vector<64x32xf32>
    %65 = tpu.reciprocal %64 {approx = true} : vector<64x32xf32> -> vector<64x32xf32>
    %66 = arith.truncf %65 : vector<64x32xf32> to vector<64x32xbf16>
    %cst_30 = arith.constant dense<0.000000e+00> : vector<64x256xf32>
    %67 = tpu.matmul %66, %3, %cst_30 {dimension_numbers = #tpu.dot_dimension_numbers<[1], [1], [0], [0], [0, 0, 1, 0], [], []>} : vector<64x32xbf16>, vector<256x32xbf16>, vector<64x256xf32> -> vector<64x256xf32>
    %68 = arith.mulf %60, %67 : vector<64x256xf32>
    %69 = arith.truncf %68 : vector<64x256xf32> to vector<64x256xbf16>
    %70 = tpu.concatenate %48, %48, %48, %48 in 0 : vector<64x32xf32>, vector<64x32xf32>, vector<64x32xf32>, vector<64x32xf32> -> vector<256x32xf32>
    %71 = arith.mulf %70, %5 : vector<256x32xf32>
    %72 = arith.truncf %71 : vector<256x32xf32> to vector<256x32xbf16>
    %cst_31 = arith.constant dense<0.000000e+00> : vector<64x32xf32>
    %73 = tpu.matmul %69, %72, %cst_31 {dimension_numbers = #tpu.dot_dimension_numbers<[1], [0], [0], [1], [0, 0, 1, 1], [], []>} : vector<64x256xbf16>, vector<256x32xbf16>, vector<64x32xf32> -> vector<64x32xf32>
    %74 = arith.truncf %73 : vector<64x32xf32> to vector<64x32xbf16>
    %cst_32 = arith.constant dense<0.000000e+00> : vector<64x32xf32>
    %75 = tpu.matmul %74, %14, %cst_32 {dimension_numbers = #tpu.dot_dimension_numbers<[1], [0], [0], [1], [0, 0, 1, 1], [], []>} : vector<64x32xbf16>, vector<32x32xbf16>, vector<64x32xf32> -> vector<64x32xf32>
    %76 = vector.broadcast %18 : vector<1x32xf32> to vector<64x32xf32>
    %77 = arith.addf %75, %76 : vector<64x32xf32>
    %78 = arith.addf %77, %12 : vector<64x32xf32>
    %79 = vector.broadcast %0 : vector<64x1xf32> to vector<64x32xf32>
    %80 = arith.mulf %78, %79 : vector<64x32xf32>
    %cst_33 = arith.constant 0.000000e+00 : f32
    %81 = vector.broadcast %cst_33 : f32 to vector<64x32xf32>
    %82 = arith.cmpf ogt, %80, %81 : vector<64x32xf32>
    %83 = math.exp %80 : vector<64x32xf32>
    %cst_34 = arith.constant 1.000000e+00 : f32
    %84 = vector.broadcast %cst_34 : f32 to vector<64x32xf32>
    %85 = arith.subf %83, %84 : vector<64x32xf32>
    %86 = arith.select %82, %80, %85 : vector<64x32xi1>, vector<64x32xf32>
    %c128 = arith.constant 128 : index
    %c0_35 = arith.constant 0 : index
    %87 = vector.load %arg1[%c128, %c0_35] : memref<192x96xbf16, #tpu.memory_space<vmem>>, vector<32x96xbf16>
    %c160 = arith.constant 160 : index
    %c0_36 = arith.constant 0 : index
    %88 = vector.load %arg1[%c160, %c0_36] : memref<192x96xbf16, #tpu.memory_space<vmem>>, vector<32x32xbf16>
    %89 = vector.extract_strided_slice %6 {offsets = [2, 0], sizes = [1, 96], strides = [1, 1]} : vector<9x96xf32> to vector<1x96xf32>
    %90 = vector.extract_strided_slice %6 {offsets = [4, 0], sizes = [1, 32], strides = [1, 1]} : vector<9x96xf32> to vector<1x32xf32>
    %91 = vector.extract_strided_slice %6 {offsets = [6, 0], sizes = [1, 32], strides = [1, 1]} : vector<9x96xf32> to vector<1x32xf32>
    %92 = vector.extract_strided_slice %6 {offsets = [8, 0], sizes = [1, 32], strides = [1, 1]} : vector<9x96xf32> to vector<1x32xf32>
    %c2 = arith.constant 2 : index
    %c0_37 = arith.constant 0 : index
    %c0_38 = arith.constant 0 : index
    %93 = vector.load %arg4[%c2, %c0_37, %c0_38] : memref<3x64x256xf32, #tpu.memory_space<vmem>>, vector<1x64x256xf32>
    %94 = vector.shape_cast %93 : vector<1x64x256xf32> to vector<64x256xf32>
    %cst_39 = arith.constant dense<0.000000e+00> : vector<64xf32>
    %95 = vector.multi_reduction <add>, %86, %cst_39 [1] : vector<64x32xf32> to vector<64xf32>
    %96 = vector.shape_cast %95 : vector<64xf32> to vector<64x1xf32>
    %cst_40 = arith.constant 3.200000e+01 : f32
    %97 = vector.broadcast %cst_40 : f32 to vector<64x1xf32>
    %98 = arith.divf %96, %97 : vector<64x1xf32>
    %99 = vector.broadcast %98 : vector<64x1xf32> to vector<64x32xf32>
    %100 = arith.subf %86, %99 : vector<64x32xf32>
    %101 = arith.mulf %100, %100 : vector<64x32xf32>
    %cst_41 = arith.constant dense<0.000000e+00> : vector<64xf32>
    %102 = vector.multi_reduction <add>, %101, %cst_41 [1] : vector<64x32xf32> to vector<64xf32>
    %103 = vector.shape_cast %102 : vector<64xf32> to vector<64x1xf32>
    %cst_42 = arith.constant 3.200000e+01 : f32
    %104 = vector.broadcast %cst_42 : f32 to vector<64x1xf32>
    %105 = arith.divf %103, %104 : vector<64x1xf32>
    %cst_43 = arith.constant 9.99999974E-6 : f32
    %106 = vector.broadcast %cst_43 : f32 to vector<64x1xf32>
    %107 = arith.addf %105, %106 : vector<64x1xf32>
    %108 = math.rsqrt %107 : vector<64x1xf32>
    %109 = vector.broadcast %108 : vector<64x1xf32> to vector<64x32xf32>
    %110 = arith.mulf %100, %109 : vector<64x32xf32>
    %111 = vector.broadcast %90 : vector<1x32xf32> to vector<64x32xf32>
    %112 = arith.mulf %110, %111 : vector<64x32xf32>
    %113 = vector.broadcast %91 : vector<1x32xf32> to vector<64x32xf32>
    %114 = arith.addf %112, %113 : vector<64x32xf32>
    %115 = arith.truncf %114 : vector<64x32xf32> to vector<64x32xbf16>
    %cst_44 = arith.constant dense<0.000000e+00> : vector<64x96xf32>
    %116 = tpu.matmul %115, %87, %cst_44 {dimension_numbers = #tpu.dot_dimension_numbers<[1], [0], [0], [1], [0, 0, 1, 1], [], []>} : vector<64x32xbf16>, vector<32x96xbf16>, vector<64x96xf32> -> vector<64x96xf32>
    %117 = vector.broadcast %89 : vector<1x96xf32> to vector<64x96xf32>
    %118 = arith.addf %116, %117 : vector<64x96xf32>
    %119 = vector.extract_strided_slice %118 {offsets = [0, 0], sizes = [64, 32], strides = [1, 1]} : vector<64x96xf32> to vector<64x32xf32>
    %120 = arith.truncf %119 : vector<64x32xf32> to vector<64x32xbf16>
    %121 = vector.extract_strided_slice %118 {offsets = [0, 32], sizes = [64, 32], strides = [1, 1]} : vector<64x96xf32> to vector<64x32xf32>
    %122 = vector.extract_strided_slice %118 {offsets = [0, 64], sizes = [64, 32], strides = [1, 1]} : vector<64x96xf32> to vector<64x32xf32>
    %123 = tpu.transpose %121, [1, 0] : vector<64x32xf32> -> vector<32x64xf32>
    %124 = tpu.concatenate %123, %123, %123, %123 in 1 : vector<32x64xf32>, vector<32x64xf32>, vector<32x64xf32>, vector<32x64xf32> -> vector<32x256xf32>
    %125 = arith.mulf %124, %4 : vector<32x256xf32>
    %126 = arith.truncf %125 : vector<32x256xf32> to vector<32x256xbf16>
    %cst_45 = arith.constant dense<0.000000e+00> : vector<64x256xf32>
    %127 = tpu.matmul %120, %126, %cst_45 {dimension_numbers = #tpu.dot_dimension_numbers<[1], [0], [0], [1], [0, 0, 1, 1], [], []>} : vector<64x32xbf16>, vector<32x256xbf16>, vector<64x256xf32> -> vector<64x256xf32>
    %128 = arith.addf %127, %94 : vector<64x256xf32>
    %cst_46 = arith.constant dense<0xFF800000> : vector<64xf32>
    %129 = vector.multi_reduction <maximumf>, %128, %cst_46 [1] : vector<64x256xf32> to vector<64xf32>
    %130 = vector.shape_cast %129 : vector<64xf32> to vector<64x1xf32>
    %131 = vector.broadcast %130 : vector<64x1xf32> to vector<64x256xf32>
    %132 = arith.subf %128, %131 : vector<64x256xf32>
    %133 = math.exp %132 : vector<64x256xf32>
    %134 = arith.mulf %133, %2 : vector<64x256xf32>
    %135 = arith.truncf %134 : vector<64x256xf32> to vector<64x256xbf16>
    %cst_47 = arith.constant dense<0.000000e+00> : vector<64x32xf32>
    %136 = tpu.matmul %135, %3, %cst_47 {dimension_numbers = #tpu.dot_dimension_numbers<[1], [0], [0], [1], [0, 0, 1, 1], [], []>} : vector<64x256xbf16>, vector<256x32xbf16>, vector<64x32xf32> -> vector<64x32xf32>
    %cst_48 = arith.constant 1.000000e-30 : f32
    %137 = vector.broadcast %cst_48 : f32 to vector<64x32xf32>
    %138 = arith.maximumf %136, %137 : vector<64x32xf32>
    %139 = tpu.reciprocal %138 {approx = true} : vector<64x32xf32> -> vector<64x32xf32>
    %140 = arith.truncf %139 : vector<64x32xf32> to vector<64x32xbf16>
    %cst_49 = arith.constant dense<0.000000e+00> : vector<64x256xf32>
    %141 = tpu.matmul %140, %3, %cst_49 {dimension_numbers = #tpu.dot_dimension_numbers<[1], [1], [0], [0], [0, 0, 1, 0], [], []>} : vector<64x32xbf16>, vector<256x32xbf16>, vector<64x256xf32> -> vector<64x256xf32>
    %142 = arith.mulf %134, %141 : vector<64x256xf32>
    %143 = arith.truncf %142 : vector<64x256xf32> to vector<64x256xbf16>
    %144 = tpu.concatenate %122, %122, %122, %122 in 0 : vector<64x32xf32>, vector<64x32xf32>, vector<64x32xf32>, vector<64x32xf32> -> vector<256x32xf32>
    %145 = arith.mulf %144, %5 : vector<256x32xf32>
    %146 = arith.truncf %145 : vector<256x32xf32> to vector<256x32xbf16>
    %cst_50 = arith.constant dense<0.000000e+00> : vector<64x32xf32>
    %147 = tpu.matmul %143, %146, %cst_50 {dimension_numbers = #tpu.dot_dimension_numbers<[1], [0], [0], [1], [0, 0, 1, 1], [], []>} : vector<64x256xbf16>, vector<256x32xbf16>, vector<64x32xf32> -> vector<64x32xf32>
    %148 = arith.truncf %147 : vector<64x32xf32> to vector<64x32xbf16>
    %cst_51 = arith.constant dense<0.000000e+00> : vector<64x32xf32>
    %149 = tpu.matmul %148, %88, %cst_51 {dimension_numbers = #tpu.dot_dimension_numbers<[1], [0], [0], [1], [0, 0, 1, 1], [], []>} : vector<64x32xbf16>, vector<32x32xbf16>, vector<64x32xf32> -> vector<64x32xf32>
    %150 = vector.broadcast %92 : vector<1x32xf32> to vector<64x32xf32>
    %151 = arith.addf %149, %150 : vector<64x32xf32>
    %152 = arith.addf %151, %86 : vector<64x32xf32>
    %153 = vector.broadcast %0 : vector<64x1xf32> to vector<64x32xf32>
    %154 = arith.mulf %152, %153 : vector<64x32xf32>
    %c0_52 = arith.constant 0 : index
    %c0_53 = arith.constant 0 : index
    %155 = vector.load %arg8[%c0_52, %c0_53] : memref<64x32xf32, #tpu.memory_space<vmem>>, vector<64x32xf32>
    tpu.vector_store %arg8[%c0_52, %c0_53], %154 {strides = array<i32>} : memref<64x32xf32, #tpu.memory_space<vmem>>, vector<64x32xf32>,
    return
  }
}

</mosaic_0001>

<llo_original>
// kernel: tpu_custom_call.1
$region0: #{tpu_custom_call.1}
  #allocation0 [shape = 'u32[]', space=smem, size = 0x4, offset = 0x4, fixed_abs, tag = 'smem constant byte address 0x4 - core index']
  #allocation1 [shape = 'u32[144,128]{1,0:T(1,128)}', space=vmem, size = 0x12000, scoped, tag = 'internal scratch']
  %s0 = inlined_call_operand.hbm [shape: bf16[64,64], index: 0, kind: input, shape index: {}]
  %s1 = inlined_call_operand.vmem [shape: bf16[192,96], index: 1, kind: input, shape index: {}]
  %s2 = inlined_call_operand.hbm [shape: f32[9,96], index: 2, kind: input, shape index: {}]
  %s3 = inlined_call_operand.vmem [shape: f32[64,1], index: 3, kind: input, shape index: {}]
  %s4 = inlined_call_operand.vmem [shape: f32[3,64,256], index: 4, kind: input, shape index: {}]
  %s5 = inlined_call_operand.vmem [shape: bf16[256,32], index: 5, kind: input, shape index: {}]
  %s6 = inlined_call_operand.vmem [shape: f32[32,256], index: 6, kind: input, shape index: {}]
  %s7 = inlined_call_operand.vmem [shape: f32[256,32], index: 7, kind: input, shape index: {}]
  %s8 = inlined_call_operand.vmem [shape: f32[64,32], index: 8, kind: output, shape index: {}]
  %s9 = sld [smem:[#allocation0]]
  $region50: #{tpu_custom_call.1} parent=0
    _
  %s11 = ssub.s32 1, %s9
  %s12 = scalar_select 0, %s11, %s9
  $region1: #{tpu_custom_call.1} parent=0
    #allocation2 [shape = 'u8[16384]{0}', space=vmem, size = 0x4000, scoped, tag = 'input window, operand 0, single buffered']
    #allocation3 [shape = 's32[1]{0}', space=sflag, size = 0x4, scoped, tag = 'scoped memory for tpu_custom_call.1']
    #allocation4 [shape = 'u8[8192]{0}', space=vmem, size = 0x2000, scoped, tag = 'input window, operand 2, single buffered']
    #allocation5 [shape = 's32[1]{0}', space=sflag, size = 0x4, scoped, tag = 'scoped memory for tpu_custom_call.1']
    %13 = vsyncpa [#allocation3], 0
    %14 = vsyncpa [#allocation5], 0
    // Predicated region
    $region2: #{tpu_custom_call.1} parent=1 // pred_check
      _
    $region3: #{tpu_custom_call.1} parent=1 // pred_check_branch
      %16 = sbr.rel (0) target = $region5
    $region4: #{tpu_custom_call.1} parent=1 // pred_region
      %s18 = ssub.s32 512, 512
      %19 = vsyncadd [#allocation3], %s18
      %s20 = sshll.u32 [#allocation2], 4
      %s21 = int_to_ptr.vmem [resolvable:$true] %s20
      %26 = dma.hbm_to_vmem [thread:$0]  %s0, 512, %s21, [#allocation3], 64, 64, 4
    $region5: #{tpu_custom_call.1} parent=1 // pred_fallthru
      _
    // Predicated region
    $region6: #{tpu_custom_call.1} parent=1 // pred_check
      _
    $region7: #{tpu_custom_call.1} parent=1 // pred_check_branch
      %28 = sbr.rel (0) target = $region9
    $region8: #{tpu_custom_call.1} parent=1 // pred_region
      _
    $region9: #{tpu_custom_call.1} parent=1 // pred_fallthru
      _
    // Predicated region
    $region10: #{tpu_custom_call.1} parent=1 // pred_check
      _
    $region11: #{tpu_custom_call.1} parent=1 // pred_check_branch
      %30 = sbr.rel (0) target = $region13
    $region12: #{tpu_custom_call.1} parent=1 // pred_region
      %s32 = ssub.s32 256, 256
      %33 = vsyncadd [#allocation5], %s32
      %s34 = sshll.u32 [#allocation4], 4
      %s35 = int_to_ptr.vmem [resolvable:$true] %s34
      %40 = dma.hbm_to_vmem [thread:$0]  %s2, 256, %s35, [#allocation5], 128, 128, 8
    $region13: #{tpu_custom_call.1} parent=1 // pred_fallthru
      _
    // Predicated region
    $region14: #{tpu_custom_call.1} parent=1 // pred_check
      _
    $region15: #{tpu_custom_call.1} parent=1 // pred_check_branch
      %42 = sbr.rel (0) target = $region17
    $region16: #{tpu_custom_call.1} parent=1 // pred_region
      _
    $region17: #{tpu_custom_call.1} parent=1 // pred_fallthru
      _
    // Predicated region
    $region18: #{tpu_custom_call.1} parent=1 // pred_check
      _
    $region19: #{tpu_custom_call.1} parent=1 // pred_check_branch
      %44 = sbr.rel (0) target = $region21
    $region20: #{tpu_custom_call.1} parent=1 // pred_region
      _
    $region21: #{tpu_custom_call.1} parent=1 // pred_fallthru
      _
    // Predicated region
    $region22: #{tpu_custom_call.1} parent=1 // pred_check
      _
    $region23: #{tpu_custom_call.1} parent=1 // pred_check_branch
      %46 = sbr.rel (0) target = $region25
    $region24: #{tpu_custom_call.1} parent=1 // pred_region
      _
    $region25: #{tpu_custom_call.1} parent=1 // pred_fallthru
      _
    // Predicated region
    $region26: #{tpu_custom_call.1} parent=1 // pred_check
      _
    $region27: #{tpu_custom_call.1} parent=1 // pred_check_branch
      %48 = sbr.rel (0) target = $region29
    $region28: #{tpu_custom_call.1} parent=1 // pred_region
      _
    $region29: #{tpu_custom_call.1} parent=1 // pred_fallthru
      _
    // Predicated region
    $region30: #{tpu_custom_call.1} parent=1 // pred_check
      _
    $region31: #{tpu_custom_call.1} parent=1 // pred_check_branch
      %50 = sbr.rel (0) target = $region33
    $region32: #{tpu_custom_call.1} parent=1 // pred_region
      _
    $region33: #{tpu_custom_call.1} parent=1 // pred_fallthru
      _
    // Predicated region
    $region34: #{tpu_custom_call.1} parent=1 // pred_check
      _
    $region35: #{tpu_custom_call.1} parent=1 // pred_check_branch
      %52 = sbr.rel (0) target = $region37
    $region36: #{tpu_custom_call.1} parent=1 // pred_region
      %53 = dma.done [#allocation3], 512
    $region37: #{tpu_custom_call.1} parent=1 // pred_fallthru
      _
    // Predicated region
    $region38: #{tpu_custom_call.1} parent=1 // pred_check
      _
    $region39: #{tpu_custom_call.1} parent=1 // pred_check_branch
      %55 = sbr.rel (0) target = $region41
    $region40: #{tpu_custom_call.1} parent=1 // pred_region
      %56 = dma.done [#allocation5], 256
    $region41: #{tpu_custom_call.1} parent=1 // pred_fallthru
      _
    %v58 = vld [vmem:[%s3] sm:$0xff]
    %v59 = vld [vmem:[%s3 + $0x8] sm:$0xff]
    %v60 = vld [vmem:[%s3 + $0x10] sm:$0xff]
    %v61 = vld [vmem:[%s3 + $0x18] sm:$0xff]
    %v62 = vld [vmem:[%s3 + $0x20] sm:$0xff]
    %v63 = vld [vmem:[%s3 + $0x28] sm:$0xff]
    %v64 = vld [vmem:[%s3 + $0x30] sm:$0xff]
    %v65 = vld [vmem:[%s3 + $0x38] sm:$0xff]
    %v66 = vld [vmem:[%s4] sm:$0xff]
    %v67 = vld [vmem:[%s4 + $0x8] sm:$0xff]
    %v68 = vld [vmem:[%s4 + $0x10] sm:$0xff]
    %v69 = vld [vmem:[%s4 + $0x18] sm:$0xff]
    %v70 = vld [vmem:[%s4 + $0x20] sm:$0xff]
    %v71 = vld [vmem:[%s4 + $0x28] sm:$0xff]
    %v72 = vld [vmem:[%s4 + $0x30] sm:$0xff]
    %v73 = vld [vmem:[%s4 + $0x38] sm:$0xff]
    %v74 = vld [vmem:[%s4 + $0x40] sm:$0xff]
    %v75 = vld [vmem:[%s4 + $0x48] sm:$0xff]
    %v76 = vld [vmem:[%s4 + $0x50] sm:$0xff]
    %v77 = vld [vmem:[%s4 + $0x58] sm:$0xff]
    %v78 = vld [vmem:[%s4 + $0x60] sm:$0xff]
    %v79 = vld [vmem:[%s4 + $0x68] sm:$0xff]
    %v80 = vld [vmem:[%s4 + $0x70] sm:$0xff]
    %v81 = vld [vmem:[%s4 + $0x78] sm:$0xff]
    %v82 = vld [vmem:[%s5] sm:$0xf]
    %v83 = vld [vmem:[%s5 + $0x4] sm:$0xf]
    %v84 = vld [vmem:[%s5 + $0x8] sm:$0xf]
    %v85 = vld [vmem:[%s5 + $0xc] sm:$0xf]
    %v86 = vld [vmem:[%s5 + $0x10] sm:$0xf]
    %v87 = vld [vmem:[%s5 + $0x14] sm:$0xf]
    %v88 = vld [vmem:[%s5 + $0x18] sm:$0xf]
    %v89 = vld [vmem:[%s5 + $0x1c] sm:$0xf]
    %v90 = vld [vmem:[%s5 + $0x20] sm:$0xf]
    %v91 = vld [vmem:[%s5 + $0x24] sm:$0xf]
    %v92 = vld [vmem:[%s5 + $0x28] sm:$0xf]
    %v93 = vld [vmem:[%s5 + $0x2c] sm:$0xf]
    %v94 = vld [vmem:[%s5 + $0x30] sm:$0xf]
    %v95 = vld [vmem:[%s5 + $0x34] sm:$0xf]
    %v96 = vld [vmem:[%s5 + $0x38] sm:$0xf]
    %v97 = vld [vmem:[%s5 + $0x3c] sm:$0xf]
    %v98 = vld [vmem:[%s5 + $0x40] sm:$0xf]
    %v99 = vld [vmem:[%s5 + $0x44] sm:$0xf]
    %v100 = vld [vmem:[%s5 + $0x48] sm:$0xf]
    %v101 = vld [vmem:[%s5 + $0x4c] sm:$0xf]
    %v102 = vld [vmem:[%s5 + $0x50] sm:$0xf]
    %v103 = vld [vmem:[%s5 + $0x54] sm:$0xf]
    %v104 = vld [vmem:[%s5 + $0x58] sm:$0xf]
    %v105 = vld [vmem:[%s5 + $0x5c] sm:$0xf]
    %v106 = vld [vmem:[%s5 + $0x60] sm:$0xf]
    %v107 = vld [vmem:[%s5 + $0x64] sm:$0xf]
    %v108 = vld [vmem:[%s5 + $0x68] sm:$0xf]
    %v109 = vld [vmem:[%s5 + $0x6c] sm:$0xf]
    %v110 = vld [vmem:[%s5 + $0x70] sm:$0xf]
    %v111 = vld [vmem:[%s5 + $0x74] sm:$0xf]
    %v112 = vld [vmem:[%s5 + $0x78] sm:$0xf]
    %v113 = vld [vmem:[%s5 + $0x7c] sm:$0xf]
    %v114 = vld [vmem:[%s6] sm:$0xff]
    %v115 = vld [vmem:[%s6 + $0x8] sm:$0xff]
    %v116 = vld [vmem:[%s6 + $0x10] sm:$0xff]
    %v117 = vld [vmem:[%s6 + $0x18] sm:$0xff]
    %v118 = vld [vmem:[%s6 + $0x20] sm:$0xff]
    %v119 = vld [vmem:[%s6 + $0x28] sm:$0xff]
    %v120 = vld [vmem:[%s6 + $0x30] sm:$0xff]
    %v121 = vld [vmem:[%s6 + $0x38] sm:$0xff]
    %v122 = vld [vmem:[%s7] sm:$0xff]
    %v123 = vld [vmem:[%s7 + $0x8] sm:$0xff]
    %v124 = vld [vmem:[%s7 + $0x10] sm:$0xff]
    %v125 = vld [vmem:[%s7 + $0x18] sm:$0xff]
    %v126 = vld [vmem:[%s7 + $0x20] sm:$0xff]
    %v127 = vld [vmem:[%s7 + $0x28] sm:$0xff]
    %v128 = vld [vmem:[%s7 + $0x30] sm:$0xff]
    %v129 = vld [vmem:[%s7 + $0x38] sm:$0xff]
    %v130 = vld [vmem:[%s7 + $0x40] sm:$0xff]
    %v131 = vld [vmem:[%s7 + $0x48] sm:$0xff]
    %v132 = vld [vmem:[%s7 + $0x50] sm:$0xff]
    %v133 = vld [vmem:[%s7 + $0x58] sm:$0xff]
    %v134 = vld [vmem:[%s7 + $0x60] sm:$0xff]
    %v135 = vld [vmem:[%s7 + $0x68] sm:$0xff]
    %v136 = vld [vmem:[%s7 + $0x70] sm:$0xff]
    %v137 = vld [vmem:[%s7 + $0x78] sm:$0xff]
    %v138 = vld [vmem:[%s7 + $0x80] sm:$0xff]
    %v139 = vld [vmem:[%s7 + $0x88] sm:$0xff]
    %v140 = vld [vmem:[%s7 + $0x90] sm:$0xff]
    %v141 = vld [vmem:[%s7 + $0x98] sm:$0xff]
    %v142 = vld [vmem:[%s7 + $0xa0] sm:$0xff]
    %v143 = vld [vmem:[%s7 + $0xa8] sm:$0xff]
    %v144 = vld [vmem:[%s7 + $0xb0] sm:$0xff]
    %v145 = vld [vmem:[%s7 + $0xb8] sm:$0xff]
    %v146 = vld [vmem:[%s7 + $0xc0] sm:$0xff]
    %v147 = vld [vmem:[%s7 + $0xc8] sm:$0xff]
    %v148 = vld [vmem:[%s7 + $0xd0] sm:$0xff]
    %v149 = vld [vmem:[%s7 + $0xd8] sm:$0xff]
    %v150 = vld [vmem:[%s7 + $0xe0] sm:$0xff]
    %v151 = vld [vmem:[%s7 + $0xe8] sm:$0xff]
    %v152 = vld [vmem:[%s7 + $0xf0] sm:$0xff]
    %v153 = vld [vmem:[%s7 + $0xf8] sm:$0xff]
    %v154 = vld [vmem:[#allocation4] sm:$0xff]
    %v155 = vld [vmem:[#allocation4 + $0x8] sm:$0x1]
    %v156 = vld [vmem:[%s1] sm:$0xf]
    %v157 = vld [vmem:[%s1 + $0x4] sm:$0xf]
    %v158 = vld [vmem:[%s1 + $0x8] sm:$0xf]
    %v159 = vld [vmem:[%s1 + $0xc] sm:$0xf]
    %v160 = vld [vmem:[%s1 + $0x10] sm:$0xf]
    %v161 = vld [vmem:[%s1 + $0x14] sm:$0xf]
    %v162 = vld [vmem:[%s1 + $0x18] sm:$0xf]
    %v163 = vld [vmem:[%s1 + $0x1c] sm:$0xf]
    %v164 = vld [vmem:[#allocation2] sm:$0xf]
    %v165 = vld [vmem:[#allocation2 + $0x4] sm:$0xf]
    %v166 = vld [vmem:[#allocation2 + $0x8] sm:$0xf]
    %v167 = vld [vmem:[#allocation2 + $0xc] sm:$0xf]
    %v168 = vld [vmem:[#allocation2 + $0x10] sm:$0xf]
    %v169 = vld [vmem:[#allocation2 + $0x14] sm:$0xf]
    %v170 = vld [vmem:[#allocation2 + $0x18] sm:$0xf]
    %v171 = vld [vmem:[#allocation2 + $0x1c] sm:$0xf]
    %v172 = vlaneseq
    %v173 = vshrl.u32 %v172, 7
    %v174 = vsub.s32 0, %v173
    %v175 = vrot.slane %v154, %v174
    %v184 = vunpack.c.l.b16 %v164
    %v185 = vunpack.c.l.b16 %v165
    %v186 = vunpack.c.l.b16 %v166
    %v187 = vunpack.c.l.b16 %v167
    %v188 = vunpack.c.l.b16 %v168
    %v189 = vunpack.c.l.b16 %v169
    %v190 = vunpack.c.l.b16 %v170
    %v191 = vunpack.c.l.b16 %v171
    %v192 = vpack.c.b16 %v185, %v184
    %v193 = vpack.c.b16 %v187, %v186
    %v194 = vpack.c.b16 %v189, %v188
    %v195 = vpack.c.b16 %v191, %v190
    %v204 = vunpack.c.l.b16 %v156
    %v205 = vunpack.c.l.b16 %v157
    %v206 = vunpack.c.l.b16 %v158
    %v207 = vunpack.c.l.b16 %v159
    %v208 = vunpack.c.l.b16 %v160
    %v209 = vunpack.c.l.b16 %v161
    %v210 = vunpack.c.l.b16 %v162
    %v211 = vunpack.c.l.b16 %v163
    %v212 = vpack.c.b16 %v205, %v204
    %v213 = vpack.c.b16 %v207, %v206
    %v214 = vpack.c.b16 %v209, %v208
    %v215 = vpack.c.b16 %v211, %v210
    %vm220 = vcmask 523264
    %v222 = vsel %vm220, %v192, 0
    %v225 = vsel %vm220, %v193, 0
    %v228 = vsel %vm220, %v194, 0
    %v231 = vsel %vm220, %v195, 0
    %233 = vmatprep.subr.bf16.mxu0 0
    %234 = vmatpush1.bf16.msra.mxu0 0
    %235 = vmatprep.subr.bf16.mxu0 0
    %236 = vmatpush1.bf16.msra.mxu0 0
    %237 = vmatprep.subr.bf16.mxu0 0
    %238 = vmatpush1.bf16.msra.mxu0 0
    %239 = vmatprep.subr.bf16.mxu0 0
    %240 = vmatpush1.bf16.msra.mxu0 0
    %241 = vmatprep.subr.bf16.mxu0 0
    %242 = vmatpush1.bf16.msra.mxu0 %v215
    %243 = vmatprep.subr.bf16.mxu0 0
    %244 = vmatpush1.bf16.msra.mxu0 %v214
    %245 = vmatprep.subr.bf16.mxu0 0
    %246 = vmatpush1.bf16.msra.mxu0 %v213
    %247 = vmatprep.subr.bf16.mxu0 0
    %248 = vmatpush1.bf16.msra.mxu0 %v212
    %249 = vmatprep.subr.bf16.mxu0 0
    %250 = vmatpush2.bf16.msra.mxu0 0
    %251 = vmatprep.subr.bf16.mxu0 0
    %252 = vmatpush2.bf16.msra.mxu0 0
    %253 = vmatprep.subr.bf16.mxu0 0
    %254 = vmatpush2.bf16.msra.mxu0 0
    %255 = vmatprep.subr.bf16.mxu0 0
    %256 = vmatpush2.bf16.msra.mxu0 0
    %257 = vmatprep.subr.bf16.mxu0 0
    %258 = vmatpush2.bf16.msra.mxu0 0
    %259 = vmatprep.subr.bf16.mxu0 0
    %260 = vmatpush2.bf16.msra.mxu0 0
    %261 = vmatprep.subr.bf16.mxu0 0
    %262 = vmatpush2.bf16.msra.mxu0 0
    %263 = vmatprep.subr.bf16.mxu0 0
    %264 = vmatpush2.bf16.msra.mxu0 0
    %265 = vmatprep.mubr.bf16.mxu0 0
    %266 = vmatmul.mubr.bf16.gmra.mxu0 %v222
    %v267 = vpop.f32.mrf.mxu0
    %v268 = vadd.f32 %v175, %v267
    %v269 = vpop.f32.mrf.mxu0
    %v270 = vpop.f32.mrf.mxu0
    %v271 = vadd.f32 %v175, %v270
    %v272 = vpop.f32.mrf.mxu0
    %273 = vmatprep.mubr.bf16.mxu0 0
    %274 = vmatmul.mubr.bf16.gmra.mxu0 %v225
    %v275 = vpop.f32.mrf.mxu0
    %v276 = vadd.f32 %v175, %v275
    %v277 = vpop.f32.mrf.mxu0
    %v278 = vpop.f32.mrf.mxu0
    %v279 = vadd.f32 %v175, %v278
    %v280 = vpop.f32.mrf.mxu0
    %281 = vmatprep.mubr.bf16.mxu0 0
    %282 = vmatmul.mubr.bf16.gmra.mxu0 %v228
    %v283 = vpop.f32.mrf.mxu0
    %v284 = vadd.f32 %v175, %v283
    %v285 = vpop.f32.mrf.mxu0
    %v286 = vpop.f32.mrf.mxu0
    %v287 = vadd.f32 %v175, %v286
    %v288 = vpop.f32.mrf.mxu0
    %289 = vmatprep.mubr.bf16.mxu0 0
    %290 = vmatmul.mubr.bf16.gmra.mxu0 %v231
    %v291 = vpop.f32.mrf.mxu0
    %v292 = vadd.f32 %v175, %v291
    %v293 = vpop.f32.mrf.mxu0
    %v294 = vpop.f32.mrf.mxu0
    %v295 = vadd.f32 %v175, %v294
    %v296 = vpop.f32.mrf.mxu0
    %297 = vdwg.mxu0
    %v298 = vld [vmem:[%s1 + $0x20] sm:$0xf]
    %v299 = vld [vmem:[%s1 + $0x24] sm:$0xf]
    %v300 = vld [vmem:[%s1 + $0x28] sm:$0xf]
    %v301 = vld [vmem:[%s1 + $0x2c] sm:$0xf]
    %v302 = vld [vmem:[%s1 + $0x30] sm:$0xf]
    %v303 = vld [vmem:[%s1 + $0x34] sm:$0xf]
    %v304 = vld [vmem:[%s1 + $0x38] sm:$0xf]
    %v305 = vld [vmem:[%s1 + $0x3c] sm:$0xf]
    %s306 = scalar_lea.vmem %s4, 128
    %v307 = vld [vmem:[%s306] sm:$0xff]
    %v308 = vld [vmem:[%s306 + $0x8] sm:$0xff]
    %v309 = vld [vmem:[%s306 + $0x10] sm:$0xff]
    %v310 = vld [vmem:[%s306 + $0x18] sm:$0xff]
    %v311 = vld [vmem:[%s306 + $0x20] sm:$0xff]
    %v312 = vld [vmem:[%s306 + $0x28] sm:$0xff]
    %v313 = vld [vmem:[%s306 + $0x30] sm:$0xff]
    %v314 = vld [vmem:[%s306 + $0x38] sm:$0xff]
    %v315 = vld [vmem:[%s306 + $0x40] sm:$0xff]
    %v316 = vld [vmem:[%s306 + $0x48] sm:$0xff]
    %v317 = vld [vmem:[%s306 + $0x50] sm:$0xff]
    %v318 = vld [vmem:[%s306 + $0x58] sm:$0xff]
    %v319 = vld [vmem:[%s306 + $0x60] sm:$0xff]
    %v320 = vld [vmem:[%s306 + $0x68] sm:$0xff]
    %v321 = vld [vmem:[%s306 + $0x70] sm:$0xff]
    %v322 = vld [vmem:[%s306 + $0x78] sm:$0xff]
    %vm323 = vcmask 261120
    %v324 = vsel %vm323, %v268, 0.0
    %325 = vadd.xlane.f32.xlu0 %v324
    %v326 = vpop.xlane.xlu0 %325
    %v327 = vsel %vm323, %v271, 0.0
    %328 = vadd.xlane.f32.xlu0 %v327
    %v329 = vpop.xlane.xlu0 %328
    %v330 = vsel %vm323, %v276, 0.0
    %331 = vadd.xlane.f32.xlu0 %v330
    %v332 = vpop.xlane.xlu0 %331
    %v333 = vsel %vm323, %v279, 0.0
    %334 = vadd.xlane.f32.xlu0 %v333
    %v335 = vpop.xlane.xlu0 %334
    %v336 = vsel %vm323, %v284, 0.0
    %337 = vadd.xlane.f32.xlu0 %v336
    %v338 = vpop.xlane.xlu0 %337
    %v339 = vsel %vm323, %v287, 0.0
    %340 = vadd.xlane.f32.xlu0 %v339
    %v341 = vpop.xlane.xlu0 %340
    %v342 = vsel %vm323, %v292, 0.0
    %343 = vadd.xlane.f32.xlu0 %v342
    %v344 = vpop.xlane.xlu0 %343
    %v345 = vsel %vm323, %v295, 0.0
    %346 = vadd.xlane.f32.xlu0 %v345
    %v347 = vpop.xlane.xlu0 %346
    %v348 = vrcp.pop 32.0
    %v349 = vmul.f32 %v326, %v348
    %v350 = vmul.f32 %v329, %v348
    %v351 = vmul.f32 %v332, %v348
    %v352 = vmul.f32 %v335, %v348
    %v353 = vmul.f32 %v338, %v348
    %v354 = vmul.f32 %v341, %v348
    %v355 = vmul.f32 %v344, %v348
    %v356 = vmul.f32 %v347, %v348
    %v357 = vsub.f32 %v268, %v349
    %v358 = vsub.f32 %v271, %v350
    %v359 = vsub.f32 %v276, %v351
    %v360 = vsub.f32 %v279, %v352
    %v361 = vsub.f32 %v284, %v353
    %v362 = vsub.f32 %v287, %v354
    %v363 = vsub.f32 %v292, %v355
    %v364 = vsub.f32 %v295, %v356
    %v365 = vmul.f32 %v357, %v357
    %v366 = vmul.f32 %v358, %v358
    %v367 = vmul.f32 %v359, %v359
    %v368 = vmul.f32 %v360, %v360
    %v369 = vmul.f32 %v361, %v361
    %v370 = vmul.f32 %v362, %v362
    %v371 = vmul.f32 %v363, %v363
    %v372 = vmul.f32 %v364, %v364
    %v373 = vsel %vm323, %v365, 0.0
    %374 = vadd.xlane.f32.xlu0 %v373
    %v375 = vpop.xlane.xlu0 %374
    %v376 = vsel %vm323, %v366, 0.0
    %377 = vadd.xlane.f32.xlu0 %v376
    %v378 = vpop.xlane.xlu0 %377
    %v379 = vsel %vm323, %v367, 0.0
    %380 = vadd.xlane.f32.xlu0 %v379
    %v381 = vpop.xlane.xlu0 %380
    %v382 = vsel %vm323, %v368, 0.0
    %383 = vadd.xlane.f32.xlu0 %v382
    %v384 = vpop.xlane.xlu0 %383
    %v385 = vsel %vm323, %v369, 0.0
    %386 = vadd.xlane.f32.xlu0 %v385
    %v387 = vpop.xlane.xlu0 %386
    %v388 = vsel %vm323, %v370, 0.0
    %389 = vadd.xlane.f32.xlu0 %v388
    %v390 = vpop.xlane.xlu0 %389
    %v391 = vsel %vm323, %v371, 0.0
    %392 = vadd.xlane.f32.xlu0 %v391
    %v393 = vpop.xlane.xlu0 %392
    %v394 = vsel %vm323, %v372, 0.0
    %395 = vadd.xlane.f32.xlu0 %v394
    %v396 = vpop.xlane.xlu0 %395
    %v397 = vmul.f32 %v375, %v348
    %v398 = vmul.f32 %v378, %v348
    %v399 = vmul.f32 %v381, %v348
    %v400 = vmul.f32 %v384, %v348
    %v401 = vmul.f32 %v387, %v348
    %v402 = vmul.f32 %v390, %v348
    %v403 = vmul.f32 %v393, %v348
    %v404 = vmul.f32 %v396, %v348
    %v405 = vadd.f32 %v397, 1e-05
    %v406 = vadd.f32 %v398, 1e-05
    %v407 = vadd.f32 %v399, 1e-05
    %v408 = vadd.f32 %v400, 1e-05
    %v409 = vadd.f32 %v401, 1e-05
    %v410 = vadd.f32 %v402, 1e-05
    %v411 = vadd.f32 %v403, 1e-05
    %v412 = vadd.f32 %v404, 1e-05
    %v413 = vrsqrt.pop %v405
    %v414 = vrsqrt.pop %v406
    %v415 = vrsqrt.pop %v407
    %v416 = vrsqrt.pop %v408
    %v417 = vrsqrt.pop %v409
    %v418 = vrsqrt.pop %v410
    %v419 = vrsqrt.pop %v411
    %v420 = vrsqrt.pop %v412
    %v421 = vmul.f32 %v357, %v413
    %v422 = vmul.f32 %v358, %v414
    %v423 = vmul.f32 %v359, %v415
    %v424 = vmul.f32 %v360, %v416
    %v425 = vmul.f32 %v361, %v417
    %v426 = vmul.f32 %v362, %v418
    %v427 = vmul.f32 %v363, %v419
    %v428 = vmul.f32 %v364, %v420
    %v429 = vlaneseq
    %v430 = vshrl.u32 %v429, 7
    %v431 = vsub.s32 3, %v430
    %v432 = vrot.slane %v154, %v431
    %v433 = vmul.f32 %v421, %v432
    %v434 = vmul.f32 %v422, %v432
    %v435 = vmul.f32 %v423, %v432
    %v436 = vmul.f32 %v424, %v432
    %v437 = vmul.f32 %v425, %v432
    %v438 = vmul.f32 %v426, %v432
    %v439 = vmul.f32 %v427, %v432
    %v440 = vmul.f32 %v428, %v432
    %v441 = vlaneseq
    %v442 = vshrl.u32 %v441, 7
    %v443 = vsub.s32 5, %v442
    %v444 = vrot.slane %v154, %v443
    %v445 = vadd.f32 %v433, %v444
    %v446 = vadd.f32 %v434, %v444
    %v447 = vadd.f32 %v435, %v444
    %v448 = vadd.f32 %v436, %v444
    %v449 = vadd.f32 %v437, %v444
    %v450 = vadd.f32 %v438, %v444
    %v451 = vadd.f32 %v439, %v444
    %v452 = vadd.f32 %v440, %v444
    %v453 = vpack.c.bf16 %v446, %v445
    %v454 = vpack.c.bf16 %v448, %v447
    %v455 = vpack.c.bf16 %v450, %v449
    %v456 = vpack.c.bf16 %v452, %v451
    %v457 = vlaneseq
    %v458 = vshrl.u32 %v457, 7
    %v459 = vsub.s32 1, %v458
    %v460 = vrot.slane %v154, %v459
    %v465 = vunpack.c.l.b16 %v298
    %v466 = vunpack.c.l.b16 %v299
    %v467 = vunpack.c.l.b16 %v300
    %v468 = vunpack.c.l.b16 %v301
    %v469 = vpack.c.b16 %v466, %v465
    %v470 = vpack.c.b16 %v468, %v467
    %v474 = vsel %vm323, %v453, 0
    %v477 = vsel %vm323, %v454, 0
    %v480 = vsel %vm323, %v455, 0
    %v483 = vsel %vm323, %v456, 0
    %485 = vmatprep.subr.bf16.mxu0 0
    %486 = vmatpush1.bf16.msra.mxu0 0
    %487 = vmatprep.subr.bf16.mxu0 0
    %488 = vmatpush1.bf16.msra.mxu0 0
    %489 = vmatprep.subr.bf16.mxu0 0
    %490 = vmatpush1.bf16.msra.mxu0 0
    %491 = vmatprep.subr.bf16.mxu0 0
    %492 = vmatpush1.bf16.msra.mxu0 0
    %493 = vmatprep.subr.bf16.mxu0 0
    %494 = vmatpush1.bf16.msra.mxu0 0
    %495 = vmatprep.subr.bf16.mxu0 0
    %496 = vmatpush1.bf16.msra.mxu0 0
    %497 = vmatprep.subr.bf16.mxu0 0
    %498 = vmatpush1.bf16.msra.mxu0 %v470
    %499 = vmatprep.subr.bf16.mxu0 0
    %500 = vmatpush1.bf16.msra.mxu0 %v469
    %501 = vmatprep.subr.bf16.mxu0 0
    %502 = vmatpush2.bf16.msra.mxu0 0
    %503 = vmatprep.subr.bf16.mxu0 0
    %504 = vmatpush2.bf16.msra.mxu0 0
    %505 = vmatprep.subr.bf16.mxu0 0
    %506 = vmatpush2.bf16.msra.mxu0 0
    %507 = vmatprep.subr.bf16.mxu0 0
    %508 = vmatpush2.bf16.msra.mxu0 0
    %509 = vmatprep.subr.bf16.mxu0 0
    %510 = vmatpush2.bf16.msra.mxu0 0
    %511 = vmatprep.subr.bf16.mxu0 0
    %512 = vmatpush2.bf16.msra.mxu0 0
    %513 = vmatprep.subr.bf16.mxu0 0
    %514 = vmatpush2.bf16.msra.mxu0 0
    %515 = vmatprep.subr.bf16.mxu0 0
    %516 = vmatpush2.bf16.msra.mxu0 0
    %517 = vmatprep.mubr.bf16.mxu0 0
    %518 = vmatmul.mubr.bf16.gmra.mxu0 %v474
    %v519 = vpop.f32.mrf.mxu0
    %v520 = vadd.f32 %v460, %v519
    %v521 = vpop.f32.mrf.mxu0
    %v522 = vpop.f32.mrf.mxu0
    %v523 = vadd.f32 %v460, %v522
    %v524 = vpop.f32.mrf.mxu0
    %525 = vmatprep.mubr.bf16.mxu0 0
    %526 = vmatmul.mubr.bf16.gmra.mxu0 %v477
    %v527 = vpop.f32.mrf.mxu0
    %v528 = vadd.f32 %v460, %v527
    %v529 = vpop.f32.mrf.mxu0
    %v530 = vpop.f32.mrf.mxu0
    %v531 = vadd.f32 %v460, %v530
    %v532 = vpop.f32.mrf.mxu0
    %533 = vmatprep.mubr.bf16.mxu0 0
    %534 = vmatmul.mubr.bf16.gmra.mxu0 %v480
    %v535 = vpop.f32.mrf.mxu0
    %v536 = vadd.f32 %v460, %v535
    %v537 = vpop.f32.mrf.mxu0
    %v538 = vpop.f32.mrf.mxu0
    %v539 = vadd.f32 %v460, %v538
    %v540 = vpop.f32.mrf.mxu0
    %541 = vmatprep.mubr.bf16.mxu0 0
    %542 = vmatmul.mubr.bf16.gmra.mxu0 %v483
    %v543 = vpop.f32.mrf.mxu0
    %v544 = vadd.f32 %v460, %v543
    %v545 = vpop.f32.mrf.mxu0
    %v546 = vpop.f32.mrf.mxu0
    %v547 = vadd.f32 %v460, %v546
    %v548 = vpop.f32.mrf.mxu0
    %549 = vdwg.mxu0
    %v550 = vpack.c.bf16 %v523, %v520
    %v551 = vpack.c.bf16 %v531, %v528
    %v552 = vpack.c.bf16 %v539, %v536
    %v553 = vpack.c.bf16 %v547, %v544
    %562 = vrot.lane.b32.xlu0 %v520, 96
    %v563 = vpop.permute.xlu0 %562
    %564 = vrot.lane.b32.xlu0 %v523, 96
    %v565 = vpop.permute.xlu0 %564
    %566 = vrot.lane.b32.xlu0 %v528, 96
    %v567 = vpop.permute.xlu0 %566
    %568 = vrot.lane.b32.xlu0 %v531, 96
    %v569 = vpop.permute.xlu0 %568
    %570 = vrot.lane.b32.xlu0 %v536, 96
    %v571 = vpop.permute.xlu0 %570
    %572 = vrot.lane.b32.xlu0 %v539, 96
    %v573 = vpop.permute.xlu0 %572
    %574 = vrot.lane.b32.xlu0 %v544, 96
    %v575 = vpop.permute.xlu0 %574
    %576 = vrot.lane.b32.xlu0 %v547, 96
    %v577 = vpop.permute.xlu0 %576
    %586 = vxpose.xlu0.b32.start [1/16] %v563, 128
    %587 = vxpose.xlu0.b32.cont [2/16] %v565, 128
    %588 = vxpose.xlu0.b32.cont [3/16] %v567, 128
    %589 = vxpose.xlu0.b32.cont [4/16] %v569, 128
    %590 = vxpose.xlu0.b32.cont [5/16] %v571, 128
    %591 = vxpose.xlu0.b32.cont [6/16] %v573, 128
    %592 = vxpose.xlu0.b32.cont [7/16] %v575, 128
    %593 = vxpose.xlu0.b32.cont [8/16] %v577, 128
    %594 = vxpose.xlu0.b32.cont [9/16] 0.0, 128
    %595 = vxpose.xlu0.b32.cont [10/16] 0.0, 128
    %596 = vxpose.xlu0.b32.cont [11/16] 0.0, 128
    %597 = vxpose.xlu0.b32.cont [12/16] 0.0, 128
    %598 = vxpose.xlu0.b32.cont [13/16] 0.0, 128
    %599 = vxpose.xlu0.b32.cont [14/16] 0.0, 128
    %600 = vxpose.xlu0.b32.cont [15/16] 0.0, 128
    %601 = vxpose.xlu0.b32.end [16/16] 0.0, 128
    %v602 = vpop.trf.xlu0
    %v603 = vpop.trf.xlu0
    %v604 = vpop.trf.xlu0
    %v605 = vpop.trf.xlu0
    %v606 = vpop.trf.xlu0
    %v607 = vpop.trf.xlu0
    %v608 = vpop.trf.xlu0
    %v609 = vpop.trf.xlu0
    %v610 = vpop.trf.xlu0
    %v611 = vpop.trf.xlu0
    %v612 = vpop.trf.xlu0
    %v613 = vpop.trf.xlu0
    %v614 = vpop.trf.xlu0
    %v615 = vpop.trf.xlu0
    %v616 = vpop.trf.xlu0
    %v617 = vpop.trf.xlu0
    %622 = vrot.lane.b32.xlu0 %v602, 64
    %v623 = vpop.permute.xlu0 %622
    %624 = vrot.lane.b32.xlu0 %v603, 64
    %v625 = vpop.permute.xlu0 %624
    %626 = vrot.lane.b32.xlu0 %v604, 64
    %v627 = vpop.permute.xlu0 %626
    %628 = vrot.lane.b32.xlu0 %v605, 64
    %v629 = vpop.permute.xlu0 %628
    %v634 = vsel %vm220, %v602, %v623
    %v635 = vsel %vm220, %v603, %v625
    %v636 = vsel %vm220, %v604, %v627
    %v637 = vsel %vm220, %v605, %v629
    %v638 = vmul.f32 %v634, %v114
    %v639 = vmul.f32 %v634, %v115
    %v640 = vmul.f32 %v635, %v116
    %v641 = vmul.f32 %v635, %v117
    %v642 = vmul.f32 %v636, %v118
    %v643 = vmul.f32 %v636, %v119
    %v644 = vmul.f32 %v637, %v120
    %v645 = vmul.f32 %v637, %v121
    %v646 = vpack.c.bf16 %v640, %v638
    %v647 = vpack.c.bf16 %v641, %v639
    %v648 = vpack.c.bf16 %v644, %v642
    %v649 = vpack.c.bf16 %v645, %v643
    %v651 = vsel %vm323, %v550, 0
    %v654 = vsel %vm323, %v551, 0
    %v657 = vsel %vm323, %v552, 0
    %v660 = vsel %vm323, %v553, 0
    %662 = vmatprep.subr.bf16.mxu0 0
    %663 = vmatpush1.bf16.msra.mxu0 0
    %664 = vmatprep.subr.bf16.mxu0 0
    %665 = vmatpush1.bf16.msra.mxu0 0
    %666 = vmatprep.subr.bf16.mxu0 0
    %667 = vmatpush1.bf16.msra.mxu0 0
    %668 = vmatprep.subr.bf16.mxu0 0
    %669 = vmatpush1.bf16.msra.mxu0 0
    %670 = vmatprep.subr.bf16.mxu0 0
    %671 = vmatpush1.bf16.msra.mxu0 0
    %672 = vmatprep.subr.bf16.mxu0 0
    %673 = vmatpush1.bf16.msra.mxu0 0
    %674 = vmatprep.subr.bf16.mxu0 %v649
    %675 = vmatpush1.bf16.msra.mxu0 %v648
    %676 = vmatprep.subr.bf16.mxu0 %v647
    %677 = vmatpush1.bf16.msra.mxu0 %v646
    %678 = vmatprep.subr.bf16.mxu0 0
    %679 = vmatpush2.bf16.msra.mxu0 0
    %680 = vmatprep.subr.bf16.mxu0 0
    %681 = vmatpush2.bf16.msra.mxu0 0
    %682 = vmatprep.subr.bf16.mxu0 0
    %683 = vmatpush2.bf16.msra.mxu0 0
    %684 = vmatprep.subr.bf16.mxu0 0
    %685 = vmatpush2.bf16.msra.mxu0 0
    %686 = vmatprep.subr.bf16.mxu0 0
    %687 = vmatpush2.bf16.msra.mxu0 0
    %688 = vmatprep.subr.bf16.mxu0 0
    %689 = vmatpush2.bf16.msra.mxu0 0
    %690 = vmatprep.subr.bf16.mxu0 0
    %691 = vmatpush2.bf16.msra.mxu0 0
    %692 = vmatprep.subr.bf16.mxu0 0
    %693 = vmatpush2.bf16.msra.mxu0 0
    %694 = vmatprep.mubr.bf16.mxu0 0
    %695 = vmatmul.mubr.bf16.gmra.mxu0 %v651
    %v696 = vpop.f32.mrf.mxu0
    %v697 = vadd.f32 %v307, %v696
    %v698 = vpop.f32.mrf.mxu0
    %v699 = vadd.f32 %v308, %v698
    %v700 = vpop.f32.mrf.mxu0
    %v701 = vadd.f32 %v309, %v700
    %v702 = vpop.f32.mrf.mxu0
    %v703 = vadd.f32 %v310, %v702
    %704 = vmatprep.mubr.bf16.mxu0 0
    %705 = vmatmul.mubr.bf16.gmra.mxu0 %v654
    %v706 = vpop.f32.mrf.mxu0
    %v707 = vadd.f32 %v311, %v706
    %v708 = vpop.f32.mrf.mxu0
    %v709 = vadd.f32 %v312, %v708
    %v710 = vpop.f32.mrf.mxu0
    %v711 = vadd.f32 %v313, %v710
    %v712 = vpop.f32.mrf.mxu0
    %v713 = vadd.f32 %v314, %v712
    %714 = vmatprep.mubr.bf16.mxu0 0
    %715 = vmatmul.mubr.bf16.gmra.mxu0 %v657
    %v716 = vpop.f32.mrf.mxu0
    %v717 = vadd.f32 %v315, %v716
    %v718 = vpop.f32.mrf.mxu0
    %v719 = vadd.f32 %v316, %v718
    %v720 = vpop.f32.mrf.mxu0
    %v721 = vadd.f32 %v317, %v720
    %v722 = vpop.f32.mrf.mxu0
    %v723 = vadd.f32 %v318, %v722
    %724 = vmatprep.mubr.bf16.mxu0 0
    %725 = vmatmul.mubr.bf16.gmra.mxu0 %v660
    %v726 = vpop.f32.mrf.mxu0
    %v727 = vadd.f32 %v319, %v726
    %v728 = vpop.f32.mrf.mxu0
    %v729 = vadd.f32 %v320, %v728
    %v730 = vpop.f32.mrf.mxu0
    %v731 = vadd.f32 %v321, %v730
    %v732 = vpop.f32.mrf.mxu0
    %v733 = vadd.f32 %v322, %v732
    %734 = vdwg.mxu0
    %v735 = vmax.f32 %v697, %v699
    %736 = vmax.xlane.f32.xlu0 %v735
    %v737 = vpop.xlane.xlu0 %736
    %v738 = vmax.f32 %v701, %v703
    %739 = vmax.xlane.f32.xlu0 %v738
    %v740 = vpop.xlane.xlu0 %739
    %v741 = vmax.f32 %v707, %v709
    %742 = vmax.xlane.f32.xlu0 %v741
    %v743 = vpop.xlane.xlu0 %742
    %v744 = vmax.f32 %v711, %v713
    %745 = vmax.xlane.f32.xlu0 %v744
    %v746 = vpop.xlane.xlu0 %745
    %v747 = vmax.f32 %v717, %v719
    %748 = vmax.xlane.f32.xlu0 %v747
    %v749 = vpop.xlane.xlu0 %748
    %v750 = vmax.f32 %v721, %v723
    %751 = vmax.xlane.f32.xlu0 %v750
    %v752 = vpop.xlane.xlu0 %751
    %v753 = vmax.f32 %v727, %v729
    %754 = vmax.xlane.f32.xlu0 %v753
    %v755 = vpop.xlane.xlu0 %754
    %v756 = vmax.f32 %v731, %v733
    %757 = vmax.xlane.f32.xlu0 %v756
    %v758 = vpop.xlane.xlu0 %757
    %v759 = vsub.f32 %v697, %v737
    %v760 = vsub.f32 %v699, %v737
    %v761 = vsub.f32 %v701, %v740
    %v762 = vsub.f32 %v703, %v740
    %v763 = vsub.f32 %v707, %v743
    %v764 = vsub.f32 %v709, %v743
    %v765 = vsub.f32 %v711, %v746
    %v766 = vsub.f32 %v713, %v746
    %v767 = vsub.f32 %v717, %v749
    %v768 = vsub.f32 %v719, %v749
    %v769 = vsub.f32 %v721, %v752
    %v770 = vsub.f32 %v723, %v752
    %v771 = vsub.f32 %v727, %v755
    %v772 = vsub.f32 %v729, %v755
    %v773 = vsub.f32 %v731, %v758
    %v774 = vsub.f32 %v733, %v758
    %v775 = vmul.f32 %v759, 1.442695
    %v776 = vpow.pop %v775
    %v777 = vmul.f32 %v760, 1.442695
    %v778 = vpow.pop %v777
    %v779 = vmul.f32 %v761, 1.442695
    %v780 = vpow.pop %v779
    %v781 = vmul.f32 %v762, 1.442695
    %v782 = vpow.pop %v781
    %v783 = vmul.f32 %v763, 1.442695
    %v784 = vpow.pop %v783
    %v785 = vmul.f32 %v764, 1.442695
    %v786 = vpow.pop %v785
    %v787 = vmul.f32 %v765, 1.442695
    %v788 = vpow.pop %v787
    %v789 = vmul.f32 %v766, 1.442695
    %v790 = vpow.pop %v789
    %v791 = vmul.f32 %v767, 1.442695
    %v792 = vpow.pop %v791
    %v793 = vmul.f32 %v768, 1.442695
    %v794 = vpow.pop %v793
    %v795 = vmul.f32 %v769, 1.442695
    %v796 = vpow.pop %v795
    %v797 = vmul.f32 %v770, 1.442695
    %v798 = vpow.pop %v797
    %v799 = vmul.f32 %v771, 1.442695
    %v800 = vpow.pop %v799
    %v801 = vmul.f32 %v772, 1.442695
    %v802 = vpow.pop %v801
    %v803 = vmul.f32 %v773, 1.442695
    %v804 = vpow.pop %v803
    %v805 = vmul.f32 %v774, 1.442695
    %v806 = vpow.pop %v805
    %v807 = vmul.f32 %v776, %v66
    %v808 = vmul.f32 %v778, %v67
    %v809 = vmul.f32 %v780, %v68
    %v810 = vmul.f32 %v782, %v69
    %v811 = vmul.f32 %v784, %v70
    %v812 = vmul.f32 %v786, %v71
    %v813 = vmul.f32 %v788, %v72
    %v814 = vmul.f32 %v790, %v73
    %v815 = vmul.f32 %v792, %v74
    %v816 = vmul.f32 %v794, %v75
    %v817 = vmul.f32 %v796, %v76
    %v818 = vmul.f32 %v798, %v77
    %v819 = vmul.f32 %v800, %v78
    %v820 = vmul.f32 %v802, %v79
    %v821 = vmul.f32 %v804, %v80
    %v822 = vmul.f32 %v806, %v81
    %v823 = vpack.c.bf16 %v809, %v807
    %v824 = vpack.c.bf16 %v810, %v808
    %v825 = vpack.c.bf16 %v813, %v811
    %v826 = vpack.c.bf16 %v814, %v812
    %v827 = vpack.c.bf16 %v817, %v815
    %v828 = vpack.c.bf16 %v818, %v816
    %v829 = vpack.c.bf16 %v821, %v819
    %v830 = vpack.c.bf16 %v822, %v820
    %v863 = vunpack.c.l.b16 %v82
    %v864 = vunpack.c.l.b16 %v83
    %v865 = vunpack.c.l.b16 %v84
    %v866 = vunpack.c.l.b16 %v85
    %v867 = vunpack.c.l.b16 %v86
    %v868 = vunpack.c.l.b16 %v87
    %v869 = vunpack.c.l.b16 %v88
    %v870 = vunpack.c.l.b16 %v89
    %v871 = vunpack.c.l.b16 %v90
    %v872 = vunpack.c.l.b16 %v91
    %v873 = vunpack.c.l.b16 %v92
    %v874 = vunpack.c.l.b16 %v93
    %v875 = vunpack.c.l.b16 %v94
    %v876 = vunpack.c.l.b16 %v95
    %v877 = vunpack.c.l.b16 %v96
    %v878 = vunpack.c.l.b16 %v97
    %v879 = vunpack.c.l.b16 %v98
    %v880 = vunpack.c.l.b16 %v99
    %v881 = vunpack.c.l.b16 %v100
    %v882 = vunpack.c.l.b16 %v101
    %v883 = vunpack.c.l.b16 %v102
    %v884 = vunpack.c.l.b16 %v103
    %v885 = vunpack.c.l.b16 %v104
    %v886 = vunpack.c.l.b16 %v105
    %v887 = vunpack.c.l.b16 %v106
    %v888 = vunpack.c.l.b16 %v107
    %v889 = vunpack.c.l.b16 %v108
    %v890 = vunpack.c.l.b16 %v109
    %v891 = vunpack.c.l.b16 %v110
    %v892 = vunpack.c.l.b16 %v111
    %v893 = vunpack.c.l.b16 %v112
    %v894 = vunpack.c.l.b16 %v113
    %v895 = vpack.c.b16 %v864, %v863
    %v896 = vpack.c.b16 %v866, %v865
    %v897 = vpack.c.b16 %v868, %v867
    %v898 = vpack.c.b16 %v870, %v869
    %v899 = vpack.c.b16 %v872, %v871
    %v900 = vpack.c.b16 %v874, %v873
    %v901 = vpack.c.b16 %v876, %v875
    %v902 = vpack.c.b16 %v878, %v877
    %v903 = vpack.c.b16 %v880, %v879
    %v904 = vpack.c.b16 %v882, %v881
    %v905 = vpack.c.b16 %v884, %v883
    %v906 = vpack.c.b16 %v886, %v885
    %v907 = vpack.c.b16 %v888, %v887
    %v908 = vpack.c.b16 %v890, %v889
    %v909 = vpack.c.b16 %v892, %v891
    %v910 = vpack.c.b16 %v894, %v893
    %927 = vmatprep.subr.bf16.mxu0 0
    %928 = vmatpush1.bf16.msra.mxu0 %v902
    %929 = vmatprep.subr.bf16.mxu0 0
    %930 = vmatpush1.bf16.msra.mxu0 %v901
    %931 = vmatprep.subr.bf16.mxu0 0
    %932 = vmatpush1.bf16.msra.mxu0 %v900
    %933 = vmatprep.subr.bf16.mxu0 0
    %934 = vmatpush1.bf16.msra.mxu0 %v899
    %935 = vmatprep.subr.bf16.mxu0 0
    %936 = vmatpush1.bf16.msra.mxu0 %v898
    %937 = vmatprep.subr.bf16.mxu0 0
    %938 = vmatpush1.bf16.msra.mxu0 %v897
    %939 = vmatprep.subr.bf16.mxu0 0
    %940 = vmatpush1.bf16.msra.mxu0 %v896
    %941 = vmatprep.subr.bf16.mxu0 0
    %942 = vmatpush1.bf16.msra.mxu0 %v895
    %943 = vmatprep.subr.bf16.mxu0 0
    %944 = vmatpush2.bf16.msra.mxu0 %v910
    %945 = vmatprep.subr.bf16.mxu0 0
    %946 = vmatpush2.bf16.msra.mxu0 %v909
    %947 = vmatprep.subr.bf16.mxu0 0
    %948 = vmatpush2.bf16.msra.mxu0 %v908
    %949 = vmatprep.subr.bf16.mxu0 0
    %950 = vmatpush2.bf16.msra.mxu0 %v907
    %951 = vmatprep.subr.bf16.mxu0 0
    %952 = vmatpush2.bf16.msra.mxu0 %v906
    %953 = vmatprep.subr.bf16.mxu0 0
    %954 = vmatpush2.bf16.msra.mxu0 %v905
    %955 = vmatprep.subr.bf16.mxu0 0
    %956 = vmatpush2.bf16.msra.mxu0 %v904
    %957 = vmatprep.subr.bf16.mxu0 0
    %958 = vmatpush2.bf16.msra.mxu0 %v903
    %959 = vmatprep.mubr.bf16.mxu0 %v824
    %960 = vmatmul.mubr.bf16.gmra.mxu0 %v823
    %v961 = vpop.f32.mrf.mxu0
    %v962 = vadd.f32 0.0, %v961
    %v963 = vpop.f32.mrf.mxu0
    %v964 = vpop.f32.mrf.mxu0
    %v965 = vadd.f32 0.0, %v964
    %v966 = vpop.f32.mrf.mxu0
    %967 = vmatprep.mubr.bf16.mxu0 %v826
    %968 = vmatmul.mubr.bf16.gmra.mxu0 %v825
    %v969 = vpop.f32.mrf.mxu0
    %v970 = vadd.f32 0.0, %v969
    %v971 = vpop.f32.mrf.mxu0
    %v972 = vpop.f32.mrf.mxu0
    %v973 = vadd.f32 0.0, %v972
    %v974 = vpop.f32.mrf.mxu0
    %975 = vmatprep.mubr.bf16.mxu0 %v828
    %976 = vmatmul.mubr.bf16.gmra.mxu0 %v827
    %v977 = vpop.f32.mrf.mxu0
    %v978 = vadd.f32 0.0, %v977
    %v979 = vpop.f32.mrf.mxu0
    %v980 = vpop.f32.mrf.mxu0
    %v981 = vadd.f32 0.0, %v980
    %v982 = vpop.f32.mrf.mxu0
    %983 = vmatprep.mubr.bf16.mxu0 %v830
    %984 = vmatmul.mubr.bf16.gmra.mxu0 %v829
    %v985 = vpop.f32.mrf.mxu0
    %v986 = vadd.f32 0.0, %v985
    %v987 = vpop.f32.mrf.mxu0
    %v988 = vpop.f32.mrf.mxu0
    %v989 = vadd.f32 0.0, %v988
    %v990 = vpop.f32.mrf.mxu0
    %991 = vdwg.mxu0
    %v992 = vmax.f32 %v962, 1e-30
    %v993 = vmax.f32 %v965, 1e-30
    %v994 = vmax.f32 %v970, 1e-30
    %v995 = vmax.f32 %v973, 1e-30
    %v996 = vmax.f32 %v978, 1e-30
    %v997 = vmax.f32 %v981, 1e-30
    %v998 = vmax.f32 %v986, 1e-30
    %v999 = vmax.f32 %v989, 1e-30
    %v1000 = vrcp.pop %v992
    %v1001 = vrcp.pop %v993
    %v1002 = vrcp.pop %v994
    %v1003 = vrcp.pop %v995
    %v1004 = vrcp.pop %v996
    %v1005 = vrcp.pop %v997
    %v1006 = vrcp.pop %v998
    %v1007 = vrcp.pop %v999
    %v1008 = vpack.c.bf16 %v1001, %v1000
    %v1009 = vpack.c.bf16 %v1003, %v1002
    %v1010 = vpack.c.bf16 %v1005, %v1004
    %v1011 = vpack.c.bf16 %v1007, %v1006
    %v1013 = vsel %vm323, %v1008, 0
    %v1016 = vsel %vm323, %v1009, 0
    %v1019 = vsel %vm323, %v1010, 0
    %v1022 = vsel %vm323, %v1011, 0
    %v1025 = vsel %vm323, %v895, 0
    %v1028 = vsel %vm323, %v896, 0
    %v1031 = vsel %vm323, %v897, 0
    %v1034 = vsel %vm323, %v898, 0
    %v1037 = vsel %vm323, %v899, 0
    %v1040 = vsel %vm323, %v900, 0
    %v1043 = vsel %vm323, %v901, 0
    %v1046 = vsel %vm323, %v902, 0
    %v1049 = vsel %vm323, %v903, 0
    %v1052 = vsel %vm323, %v904, 0
    %v1055 = vsel %vm323, %v905, 0
    %v1058 = vsel %vm323, %v906, 0
    %v1061 = vsel %vm323, %v907, 0
    %v1064 = vsel %vm323, %v908, 0
    %v1067 = vsel %vm323, %v909, 0
    %v1070 = vsel %vm323, %v910, 0
    %1072 = vmatprep.subr.bf16.mxu0 0
    %1073 = vmatpush1.bf16.xpose.msra.mxu0 %v1046
    %1074 = vmatprep.subr.bf16.mxu0 0
    %1075 = vmatpush1.bf16.xpose.msra.mxu0 %v1043
    %1076 = vmatprep.subr.bf16.mxu0 0
    %1077 = vmatpush1.bf16.xpose.msra.mxu0 %v1040
    %1078 = vmatprep.subr.bf16.mxu0 0
    %1079 = vmatpush1.bf16.xpose.msra.mxu0 %v1037
    %1080 = vmatprep.subr.bf16.mxu0 0
    %1081 = vmatpush1.bf16.xpose.msra.mxu0 %v1034
    %1082 = vmatprep.subr.bf16.mxu0 0
    %1083 = vmatpush1.bf16.xpose.msra.mxu0 %v1031
    %1084 = vmatprep.subr.bf16.mxu0 0
    %1085 = vmatpush1.bf16.xpose.msra.mxu0 %v1028
    %1086 = vmatprep.subr.bf16.mxu0 0
    %1087 = vmatpush1.bf16.xpose.msra.mxu0 %v1025
    %1088 = vmatprep.subr.bf16.mxu0 0
    %1089 = vmatpush2.bf16.xpose.msra.mxu0 %v1070
    %1090 = vmatprep.subr.bf16.mxu0 0
    %1091 = vmatpush2.bf16.xpose.msra.mxu0 %v1067
    %1092 = vmatprep.subr.bf16.mxu0 0
    %1093 = vmatpush2.bf16.xpose.msra.mxu0 %v1064
    %1094 = vmatprep.subr.bf16.mxu0 0
    %1095 = vmatpush2.bf16.xpose.msra.mxu0 %v1061
    %1096 = vmatprep.subr.bf16.mxu0 0
    %1097 = vmatpush2.bf16.xpose.msra.mxu0 %v1058
    %1098 = vmatprep.subr.bf16.mxu0 0
    %1099 = vmatpush2.bf16.xpose.msra.mxu0 %v1055
    %1100 = vmatprep.subr.bf16.mxu0 0
    %1101 = vmatpush2.bf16.xpose.msra.mxu0 %v1052
    %1102 = vmatprep.subr.bf16.mxu0 0
    %1103 = vmatpush2.bf16.xpose.msra.mxu0 %v1049
    %1104 = vmatprep.mubr.bf16.mxu0 0
    %1105 = vmatmul.mubr.bf16.gmra.mxu0 %v1013
    %v1106 = vpop.f32.mrf.mxu0
    %v1107 = vadd.f32 0.0, %v1106
    %v1108 = vpop.f32.mrf.mxu0
    %v1109 = vadd.f32 0.0, %v1108
    %v1110 = vpop.f32.mrf.mxu0
    %v1111 = vadd.f32 0.0, %v1110
    %v1112 = vpop.f32.mrf.mxu0
    %v1113 = vadd.f32 0.0, %v1112
    %1114 = vmatprep.mubr.bf16.mxu0 0
    %1115 = vmatmul.mubr.bf16.gmra.mxu0 %v1016
    %v1116 = vpop.f32.mrf.mxu0
    %v1117 = vadd.f32 0.0, %v1116
    %v1118 = vpop.f32.mrf.mxu0
    %v1119 = vadd.f32 0.0, %v1118
    %v1120 = vpop.f32.mrf.mxu0
    %v1121 = vadd.f32 0.0, %v1120
    %v1122 = vpop.f32.mrf.mxu0
    %v1123 = vadd.f32 0.0, %v1122
    %1124 = vmatprep.mubr.bf16.mxu0 0
    %1125 = vmatmul.mubr.bf16.gmra.mxu0 %v1019
    %v1126 = vpop.f32.mrf.mxu0
    %v1127 = vadd.f32 0.0, %v1126
    %v1128 = vpop.f32.mrf.mxu0
    %v1129 = vadd.f32 0.0, %v1128
    %v1130 = vpop.f32.mrf.mxu0
    %v1131 = vadd.f32 0.0, %v1130
    %v1132 = vpop.f32.mrf.mxu0
    %v1133 = vadd.f32 0.0, %v1132
    %1134 = vmatprep.mubr.bf16.mxu0 0
    %1135 = vmatmul.mubr.bf16.gmra.mxu0 %v1022
    %v1136 = vpop.f32.mrf.mxu0
    %v1137 = vadd.f32 0.0, %v1136
    %v1138 = vpop.f32.mrf.mxu0
    %v1139 = vadd.f32 0.0, %v1138
    %v1140 = vpop.f32.mrf.mxu0
    %v1141 = vadd.f32 0.0, %v1140
    %v1142 = vpop.f32.mrf.mxu0
    %v1143 = vadd.f32 0.0, %v1142
    %1144 = vdwg.mxu0
    %v1145 = vmul.f32 %v807, %v1107
    %v1146 = vmul.f32 %v808, %v1109
    %v1147 = vmul.f32 %v809, %v1111
    %v1148 = vmul.f32 %v810, %v1113
    %v1149 = vmul.f32 %v811, %v1117
    %v1150 = vmul.f32 %v812, %v1119
    %v1151 = vmul.f32 %v813, %v1121
    %v1152 = vmul.f32 %v814, %v1123
    %v1153 = vmul.f32 %v815, %v1127
    %v1154 = vmul.f32 %v816, %v1129
    %v1155 = vmul.f32 %v817, %v1131
    %v1156 = vmul.f32 %v818, %v1133
    %v1157 = vmul.f32 %v819, %v1137
    %v1158 = vmul.f32 %v820, %v1139
    %v1159 = vmul.f32 %v821, %v1141
    %v1160 = vmul.f32 %v822, %v1143
    %v1161 = vpack.c.bf16 %v1147, %v1145
    %v1162 = vpack.c.bf16 %v1148, %v1146
    %v1163 = vpack.c.bf16 %v1151, %v1149
    %v1164 = vpack.c.bf16 %v1152, %v1150
    %v1165 = vpack.c.bf16 %v1155, %v1153
    %v1166 = vpack.c.bf16 %v1156, %v1154
    %v1167 = vpack.c.bf16 %v1159, %v1157
    %v1168 = vpack.c.bf16 %v1160, %v1158
    %1201 = vrot.lane.b32.xlu0 %v122, 64
    %v1202 = vpop.permute.xlu0 %1201
    %1203 = vrot.lane.b32.xlu0 %v123, 64
    %v1204 = vpop.permute.xlu0 %1203
    %1205 = vrot.lane.b32.xlu0 %v124, 64
    %v1206 = vpop.permute.xlu0 %1205
    %1207 = vrot.lane.b32.xlu0 %v125, 64
    %v1208 = vpop.permute.xlu0 %1207
    %1209 = vrot.lane.b32.xlu0 %v126, 64
    %v1210 = vpop.permute.xlu0 %1209
    %1211 = vrot.lane.b32.xlu0 %v127, 64
    %v1212 = vpop.permute.xlu0 %1211
    %1213 = vrot.lane.b32.xlu0 %v128, 64
    %v1214 = vpop.permute.xlu0 %1213
    %1215 = vrot.lane.b32.xlu0 %v129, 64
    %v1216 = vpop.permute.xlu0 %1215
    %1217 = vrot.lane.b32.xlu0 %v130, 64
    %v1218 = vpop.permute.xlu0 %1217
    %1219 = vrot.lane.b32.xlu0 %v131, 64
    %v1220 = vpop.permute.xlu0 %1219
    %1221 = vrot.lane.b32.xlu0 %v132, 64
    %v1222 = vpop.permute.xlu0 %1221
    %1223 = vrot.lane.b32.xlu0 %v133, 64
    %v1224 = vpop.permute.xlu0 %1223
    %1225 = vrot.lane.b32.xlu0 %v134, 64
    %v1226 = vpop.permute.xlu0 %1225
    %1227 = vrot.lane.b32.xlu0 %v135, 64
    %v1228 = vpop.permute.xlu0 %1227
    %1229 = vrot.lane.b32.xlu0 %v136, 64
    %v1230 = vpop.permute.xlu0 %1229
    %1231 = vrot.lane.b32.xlu0 %v137, 64
    %v1232 = vpop.permute.xlu0 %1231
    %1233 = vrot.lane.b32.xlu0 %v138, 64
    %v1234 = vpop.permute.xlu0 %1233
    %1235 = vrot.lane.b32.xlu0 %v139, 64
    %v1236 = vpop.permute.xlu0 %1235
    %1237 = vrot.lane.b32.xlu0 %v140, 64
    %v1238 = vpop.permute.xlu0 %1237
    %1239 = vrot.lane.b32.xlu0 %v141, 64
    %v1240 = vpop.permute.xlu0 %1239
    %1241 = vrot.lane.b32.xlu0 %v142, 64
    %v1242 = vpop.permute.xlu0 %1241
    %1243 = vrot.lane.b32.xlu0 %v143, 64
    %v1244 = vpop.permute.xlu0 %1243
    %1245 = vrot.lane.b32.xlu0 %v144, 64
    %v1246 = vpop.permute.xlu0 %1245
    %1247 = vrot.lane.b32.xlu0 %v145, 64
    %v1248 = vpop.permute.xlu0 %1247
    %1249 = vrot.lane.b32.xlu0 %v146, 64
    %v1250 = vpop.permute.xlu0 %1249
    %1251 = vrot.lane.b32.xlu0 %v147, 64
    %v1252 = vpop.permute.xlu0 %1251
    %1253 = vrot.lane.b32.xlu0 %v148, 64
    %v1254 = vpop.permute.xlu0 %1253
    %1255 = vrot.lane.b32.xlu0 %v149, 64
    %v1256 = vpop.permute.xlu0 %1255
    %1257 = vrot.lane.b32.xlu0 %v150, 64
    %v1258 = vpop.permute.xlu0 %1257
    %1259 = vrot.lane.b32.xlu0 %v151, 64
    %v1260 = vpop.permute.xlu0 %1259
    %1261 = vrot.lane.b32.xlu0 %v152, 64
    %v1262 = vpop.permute.xlu0 %1261
    %1263 = vrot.lane.b32.xlu0 %v153, 64
    %v1264 = vpop.permute.xlu0 %1263
    %v1297 = vmul.f32 %v520, %v1202
    %v1298 = vmul.f32 %v523, %v1204
    %v1299 = vmul.f32 %v528, %v1206
    %v1300 = vmul.f32 %v531, %v1208
    %v1301 = vmul.f32 %v536, %v1210
    %v1302 = vmul.f32 %v539, %v1212
    %v1303 = vmul.f32 %v544, %v1214
    %v1304 = vmul.f32 %v547, %v1216
    %v1305 = vmul.f32 %v520, %v1218
    %v1306 = vmul.f32 %v523, %v1220
    %v1307 = vmul.f32 %v528, %v1222
    %v1308 = vmul.f32 %v531, %v1224
    %v1309 = vmul.f32 %v536, %v1226
    %v1310 = vmul.f32 %v539, %v1228
    %v1311 = vmul.f32 %v544, %v1230
    %v1312 = vmul.f32 %v547, %v1232
    %v1313 = vmul.f32 %v520, %v1234
    %v1314 = vmul.f32 %v523, %v1236
    %v1315 = vmul.f32 %v528, %v1238
    %v1316 = vmul.f32 %v531, %v1240
    %v1317 = vmul.f32 %v536, %v1242
    %v1318 = vmul.f32 %v539, %v1244
    %v1319 = vmul.f32 %v544, %v1246
    %v1320 = vmul.f32 %v547, %v1248
    %v1321 = vmul.f32 %v520, %v1250
    %v1322 = vmul.f32 %v523, %v1252
    %v1323 = vmul.f32 %v528, %v1254
    %v1324 = vmul.f32 %v531, %v1256
    %v1325 = vmul.f32 %v536, %v1258
    %v1326 = vmul.f32 %v539, %v1260
    %v1327 = vmul.f32 %v544, %v1262
    %v1328 = vmul.f32 %v547, %v1264
    %v1329 = vpack.c.bf16 %v1298, %v1297
    %v1330 = vpack.c.bf16 %v1300, %v1299
    %v1331 = vpack.c.bf16 %v1302, %v1301
    %v1332 = vpack.c.bf16 %v1304, %v1303
    %v1333 = vpack.c.bf16 %v1306, %v1305
    %v1334 = vpack.c.bf16 %v1308, %v1307
    %v1335 = vpack.c.bf16 %v1310, %v1309
    %v1336 = vpack.c.bf16 %v1312, %v1311
    %v1337 = vpack.c.bf16 %v1314, %v1313
    %v1338 = vpack.c.bf16 %v1316, %v1315
    %v1339 = vpack.c.bf16 %v1318, %v1317
    %v1340 = vpack.c.bf16 %v1320, %v1319
    %v1341 = vpack.c.bf16 %v1322, %v1321
    %v1342 = vpack.c.bf16 %v1324, %v1323
    %v1343 = vpack.c.bf16 %v1326, %v1325
    %v1344 = vpack.c.bf16 %v1328, %v1327
    %1361 = vrot.lane.b32.xlu0 %v1329, 64
    %v1362 = vpop.permute.xlu0 %1361
    %1363 = vrot.lane.b32.xlu0 %v1330, 64
    %v1364 = vpop.permute.xlu0 %1363
    %1365 = vrot.lane.b32.xlu0 %v1331, 64
    %v1366 = vpop.permute.xlu0 %1365
    %1367 = vrot.lane.b32.xlu0 %v1332, 64
    %v1368 = vpop.permute.xlu0 %1367
    %1369 = vrot.lane.b32.xlu0 %v1333, 64
    %v1370 = vpop.permute.xlu0 %1369
    %1371 = vrot.lane.b32.xlu0 %v1334, 64
    %v1372 = vpop.permute.xlu0 %1371
    %1373 = vrot.lane.b32.xlu0 %v1335, 64
    %v1374 = vpop.permute.xlu0 %1373
    %1375 = vrot.lane.b32.xlu0 %v1336, 64
    %v1376 = vpop.permute.xlu0 %1375
    %1377 = vrot.lane.b32.xlu0 %v1337, 64
    %v1378 = vpop.permute.xlu0 %1377
    %1379 = vrot.lane.b32.xlu0 %v1338, 64
    %v1380 = vpop.permute.xlu0 %1379
    %1381 = vrot.lane.b32.xlu0 %v1339, 64
    %v1382 = vpop.permute.xlu0 %1381
    %1383 = vrot.lane.b32.xlu0 %v1340, 64
    %v1384 = vpop.permute.xlu0 %1383
    %1385 = vrot.lane.b32.xlu0 %v1341, 64
    %v1386 = vpop.permute.xlu0 %1385
    %1387 = vrot.lane.b32.xlu0 %v1342, 64
    %v1388 = vpop.permute.xlu0 %1387
    %1389 = vrot.lane.b32.xlu0 %v1343, 64
    %v1390 = vpop.permute.xlu0 %1389
    %1391 = vrot.lane.b32.xlu0 %v1344, 64
    %v1392 = vpop.permute.xlu0 %1391
    %1409 = vmatprep.subr.bf16.mxu0 0
    %1410 = vmatpush1.bf16.msra.mxu0 %v1376
    %1411 = vmatprep.subr.bf16.mxu0 0
    %1412 = vmatpush1.bf16.msra.mxu0 %v1374
    %1413 = vmatprep.subr.bf16.mxu0 0
    %1414 = vmatpush1.bf16.msra.mxu0 %v1372
    %1415 = vmatprep.subr.bf16.mxu0 0
    %1416 = vmatpush1.bf16.msra.mxu0 %v1370
    %1417 = vmatprep.subr.bf16.mxu0 0
    %1418 = vmatpush1.bf16.msra.mxu0 %v1368
    %1419 = vmatprep.subr.bf16.mxu0 0
    %1420 = vmatpush1.bf16.msra.mxu0 %v1366
    %1421 = vmatprep.subr.bf16.mxu0 0
    %1422 = vmatpush1.bf16.msra.mxu0 %v1364
    %1423 = vmatprep.subr.bf16.mxu0 0
    %1424 = vmatpush1.bf16.msra.mxu0 %v1362
    %1425 = vmatprep.subr.bf16.mxu0 0
    %1426 = vmatpush2.bf16.msra.mxu0 %v1392
    %1427 = vmatprep.subr.bf16.mxu0 0
    %1428 = vmatpush2.bf16.msra.mxu0 %v1390
    %1429 = vmatprep.subr.bf16.mxu0 0
    %1430 = vmatpush2.bf16.msra.mxu0 %v1388
    %1431 = vmatprep.subr.bf16.mxu0 0
    %1432 = vmatpush2.bf16.msra.mxu0 %v1386
    %1433 = vmatprep.subr.bf16.mxu0 0
    %1434 = vmatpush2.bf16.msra.mxu0 %v1384
    %1435 = vmatprep.subr.bf16.mxu0 0
    %1436 = vmatpush2.bf16.msra.mxu0 %v1382
    %1437 = vmatprep.subr.bf16.mxu0 0
    %1438 = vmatpush2.bf16.msra.mxu0 %v1380
    %1439 = vmatprep.subr.bf16.mxu0 0
    %1440 = vmatpush2.bf16.msra.mxu0 %v1378
    %1441 = vmatprep.mubr.bf16.mxu0 %v1162
    %1442 = vmatmul.mubr.bf16.gmra.mxu0 %v1161
    %v1443 = vpop.f32.mrf.mxu0
    %v1444 = vadd.f32 0.0, %v1443
    %v1445 = vpop.f32.mrf.mxu0
    %v1446 = vpop.f32.mrf.mxu0
    %v1447 = vadd.f32 0.0, %v1446
    %v1448 = vpop.f32.mrf.mxu0
    %1449 = vmatprep.mubr.bf16.mxu0 %v1164
    %1450 = vmatmul.mubr.bf16.gmra.mxu0 %v1163
    %v1451 = vpop.f32.mrf.mxu0
    %v1452 = vadd.f32 0.0, %v1451
    %v1453 = vpop.f32.mrf.mxu0
    %v1454 = vpop.f32.mrf.mxu0
    %v1455 = vadd.f32 0.0, %v1454
    %v1456 = vpop.f32.mrf.mxu0
    %1457 = vmatprep.mubr.bf16.mxu0 %v1166
    %1458 = vmatmul.mubr.bf16.gmra.mxu0 %v1165
    %v1459 = vpop.f32.mrf.mxu0
    %v1460 = vadd.f32 0.0, %v1459
    %v1461 = vpop.f32.mrf.mxu0
    %v1462 = vpop.f32.mrf.mxu0
    %v1463 = vadd.f32 0.0, %v1462
    %v1464 = vpop.f32.mrf.mxu0
    %1465 = vmatprep.mubr.bf16.mxu0 %v1168
    %1466 = vmatmul.mubr.bf16.gmra.mxu0 %v1167
    %v1467 = vpop.f32.mrf.mxu0
    %v1468 = vadd.f32 0.0, %v1467
    %v1469 = vpop.f32.mrf.mxu0
    %v1470 = vpop.f32.mrf.mxu0
    %v1471 = vadd.f32 0.0, %v1470
    %v1472 = vpop.f32.mrf.mxu0
    %1473 = vdwg.mxu0
    %v1474 = vpack.c.bf16 %v1447, %v1444
    %v1475 = vpack.c.bf16 %v1455, %v1452
    %v1476 = vpack.c.bf16 %v1463, %v1460
    %v1477 = vpack.c.bf16 %v1471, %v1468
    %v1478 = vlaneseq
    %v1479 = vshrl.u32 %v1478, 7
    %v1480 = vsub.s32 7, %v1479
    %v1481 = vrot.slane %v154, %v1480
    %v1486 = vunpack.c.l.b16 %v302
    %v1487 = vunpack.c.l.b16 %v303
    %v1488 = vunpack.c.l.b16 %v304
    %v1489 = vunpack.c.l.b16 %v305
    %v1490 = vpack.c.b16 %v1487, %v1486
    %v1491 = vpack.c.b16 %v1489, %v1488
    %v1495 = vsel %vm323, %v1474, 0
    %v1498 = vsel %vm323, %v1475, 0
    %v1501 = vsel %vm323, %v1476, 0
    %v1504 = vsel %vm323, %v1477, 0
    %1506 = vmatprep.subr.bf16.mxu0 0
    %1507 = vmatpush1.bf16.msra.mxu0 0
    %1508 = vmatprep.subr.bf16.mxu0 0
    %1509 = vmatpush1.bf16.msra.mxu0 0
    %1510 = vmatprep.subr.bf16.mxu0 0
    %1511 = vmatpush1.bf16.msra.mxu0 0
    %1512 = vmatprep.subr.bf16.mxu0 0
    %1513 = vmatpush1.bf16.msra.mxu0 0
    %1514 = vmatprep.subr.bf16.mxu0 0
    %1515 = vmatpush1.bf16.msra.mxu0 0
    %1516 = vmatprep.subr.bf16.mxu0 0
    %1517 = vmatpush1.bf16.msra.mxu0 0
    %1518 = vmatprep.subr.bf16.mxu0 0
    %1519 = vmatpush1.bf16.msra.mxu0 %v1491
    %1520 = vmatprep.subr.bf16.mxu0 0
    %1521 = vmatpush1.bf16.msra.mxu0 %v1490
    %1522 = vmatprep.subr.bf16.mxu0 0
    %1523 = vmatpush2.bf16.msra.mxu0 0
    %1524 = vmatprep.subr.bf16.mxu0 0
    %1525 = vmatpush2.bf16.msra.mxu0 0
    %1526 = vmatprep.subr.bf16.mxu0 0
    %1527 = vmatpush2.bf16.msra.mxu0 0
    %1528 = vmatprep.subr.bf16.mxu0 0
    %1529 = vmatpush2.bf16.msra.mxu0 0
    %1530 = vmatprep.subr.bf16.mxu0 0
    %1531 = vmatpush2.bf16.msra.mxu0 0
    %1532 = vmatprep.subr.bf16.mxu0 0
    %1533 = vmatpush2.bf16.msra.mxu0 0
    %1534 = vmatprep.subr.bf16.mxu0 0
    %1535 = vmatpush2.bf16.msra.mxu0 0
    %1536 = vmatprep.subr.bf16.mxu0 0
    %1537 = vmatpush2.bf16.msra.mxu0 0
    %1538 = vmatprep.mubr.bf16.mxu0 0
    %1539 = vmatmul.mubr.bf16.gmra.mxu0 %v1495
    %v1540 = vpop.f32.mrf.mxu0
    %v1541 = vadd.f32 %v1481, %v1540
    %v1542 = vpop.f32.mrf.mxu0
    %v1543 = vpop.f32.mrf.mxu0
    %v1544 = vadd.f32 %v1481, %v1543
    %v1545 = vpop.f32.mrf.mxu0
    %1546 = vmatprep.mubr.bf16.mxu0 0
    %1547 = vmatmul.mubr.bf16.gmra.mxu0 %v1498
    %v1548 = vpop.f32.mrf.mxu0
    %v1549 = vadd.f32 %v1481, %v1548
    %v1550 = vpop.f32.mrf.mxu0
    %v1551 = vpop.f32.mrf.mxu0
    %v1552 = vadd.f32 %v1481, %v1551
    %v1553 = vpop.f32.mrf.mxu0
    %1554 = vmatprep.mubr.bf16.mxu0 0
    %1555 = vmatmul.mubr.bf16.gmra.mxu0 %v1501
    %v1556 = vpop.f32.mrf.mxu0
    %v1557 = vadd.f32 %v1481, %v1556
    %v1558 = vpop.f32.mrf.mxu0
    %v1559 = vpop.f32.mrf.mxu0
    %v1560 = vadd.f32 %v1481, %v1559
    %v1561 = vpop.f32.mrf.mxu0
    %1562 = vmatprep.mubr.bf16.mxu0 0
    %1563 = vmatmul.mubr.bf16.gmra.mxu0 %v1504
    %v1564 = vpop.f32.mrf.mxu0
    %v1565 = vadd.f32 %v1481, %v1564
    %v1566 = vpop.f32.mrf.mxu0
    %v1567 = vpop.f32.mrf.mxu0
    %v1568 = vadd.f32 %v1481, %v1567
    %v1569 = vpop.f32.mrf.mxu0
    %1570 = vdwg.mxu0
    %v1571 = vadd.f32 %v1541, %v268
    %v1572 = vadd.f32 %v1544, %v271
    %v1573 = vadd.f32 %v1549, %v276
    %v1574 = vadd.f32 %v1552, %v279
    %v1575 = vadd.f32 %v1557, %v284
    %v1576 = vadd.f32 %v1560, %v287
    %v1577 = vadd.f32 %v1565, %v292
    %v1578 = vadd.f32 %v1568, %v295
    %1580 = vset.pattern.permute.xlu0 0
    %1581 = vperm.xlu0 %1580, %v58
    %v1582 = vpop.permute.xlu0 %1581
    %1585 = vset.pattern.permute.xlu0 0
    %1586 = vperm.xlu0 %1585, %v59
    %v1587 = vpop.permute.xlu0 %1586
    %1590 = vset.pattern.permute.xlu0 0
    %1591 = vperm.xlu0 %1590, %v60
    %v1592 = vpop.permute.xlu0 %1591
    %1595 = vset.pattern.permute.xlu0 0
    %1596 = vperm.xlu0 %1595, %v61
    %v1597 = vpop.permute.xlu0 %1596
    %1600 = vset.pattern.permute.xlu0 0
    %1601 = vperm.xlu0 %1600, %v62
    %v1602 = vpop.permute.xlu0 %1601
    %1605 = vset.pattern.permute.xlu0 0
    %1606 = vperm.xlu0 %1605, %v63
    %v1607 = vpop.permute.xlu0 %1606
    %1610 = vset.pattern.permute.xlu0 0
    %1611 = vperm.xlu0 %1610, %v64
    %v1612 = vpop.permute.xlu0 %1611
    %1615 = vset.pattern.permute.xlu0 0
    %1616 = vperm.xlu0 %1615, %v65
    %v1617 = vpop.permute.xlu0 %1616
    %v1619 = vmul.f32 %v1571, %v1582
    %v1620 = vmul.f32 %v1572, %v1587
    %v1621 = vmul.f32 %v1573, %v1592
    %v1622 = vmul.f32 %v1574, %v1597
    %v1623 = vmul.f32 %v1575, %v1602
    %v1624 = vmul.f32 %v1576, %v1607
    %v1625 = vmul.f32 %v1577, %v1612
    %v1626 = vmul.f32 %v1578, %v1617
    %vm1627 = vcmp.gt.f32.partialorder %v1619, 0.0
    %vm1628 = vcmp.gt.f32.partialorder %v1620, 0.0
    %vm1629 = vcmp.gt.f32.partialorder %v1621, 0.0
    %vm1630 = vcmp.gt.f32.partialorder %v1622, 0.0
    %vm1631 = vcmp.gt.f32.partialorder %v1623, 0.0
    %vm1632 = vcmp.gt.f32.partialorder %v1624, 0.0
    %vm1633 = vcmp.gt.f32.partialorder %v1625, 0.0
    %vm1634 = vcmp.gt.f32.partialorder %v1626, 0.0
    %v1635 = vmul.f32 %v1619, 1.442695
    %v1636 = vpow.pop %v1635
    %v1637 = vmul.f32 %v1620, 1.442695
    %v1638 = vpow.pop %v1637
    %v1639 = vmul.f32 %v1621, 1.442695
    %v1640 = vpow.pop %v1639
    %v1641 = vmul.f32 %v1622, 1.442695
    %v1642 = vpow.pop %v1641
    %v1643 = vmul.f32 %v1623, 1.442695
    %v1644 = vpow.pop %v1643
    %v1645 = vmul.f32 %v1624, 1.442695
    %v1646 = vpow.pop %v1645
    %v1647 = vmul.f32 %v1625, 1.442695
    %v1648 = vpow.pop %v1647
    %v1649 = vmul.f32 %v1626, 1.442695
    %v1650 = vpow.pop %v1649
    %v1651 = vsub.f32 %v1636, 1.0
    %v1652 = vsub.f32 %v1638, 1.0
    %v1653 = vsub.f32 %v1640, 1.0
    %v1654 = vsub.f32 %v1642, 1.0
    %v1655 = vsub.f32 %v1644, 1.0
    %v1656 = vsub.f32 %v1646, 1.0
    %v1657 = vsub.f32 %v1648, 1.0
    %v1658 = vsub.f32 %v1650, 1.0
    %v1659 = vsel %vm1627, %v1619, %v1651
    %v1660 = vsel %vm1628, %v1620, %v1652
    %v1661 = vsel %vm1629, %v1621, %v1653
    %v1662 = vsel %vm1630, %v1622, %v1654
    %v1663 = vsel %vm1631, %v1623, %v1655
    %v1664 = vsel %vm1632, %v1624, %v1656
    %v1665 = vsel %vm1633, %v1625, %v1657
    %v1666 = vsel %vm1634, %v1626, %v1658
    %v1667 = vld [vmem:[%s1 + $0x40] sm:$0xf]
    %v1668 = vld [vmem:[%s1 + $0x44] sm:$0xf]
    %v1669 = vld [vmem:[%s1 + $0x48] sm:$0xf]
    %v1670 = vld [vmem:[%s1 + $0x4c] sm:$0xf]
    %v1671 = vld [vmem:[%s1 + $0x50] sm:$0xf]
    %v1672 = vld [vmem:[%s1 + $0x54] sm:$0xf]
    %v1673 = vld [vmem:[%s1 + $0x58] sm:$0xf]
    %v1674 = vld [vmem:[%s1 + $0x5c] sm:$0xf]
    %s1675 = scalar_lea.vmem %s4, 256
    %v1676 = vld [vmem:[%s1675] sm:$0xff]
    %v1677 = vld [vmem:[%s1675 + $0x8] sm:$0xff]
    %v1678 = vld [vmem:[%s1675 + $0x10] sm:$0xff]
    %v1679 = vld [vmem:[%s1675 + $0x18] sm:$0xff]
    %v1680 = vld [vmem:[%s1675 + $0x20] sm:$0xff]
    %v1681 = vld [vmem:[%s1675 + $0x28] sm:$0xff]
    %v1682 = vld [vmem:[%s1675 + $0x30] sm:$0xff]
    %v1683 = vld [vmem:[%s1675 + $0x38] sm:$0xff]
    %v1684 = vld [vmem:[%s1675 + $0x40] sm:$0xff]
    %v1685 = vld [vmem:[%s1675 + $0x48] sm:$0xff]
    %v1686 = vld [vmem:[%s1675 + $0x50] sm:$0xff]
    %v1687 = vld [vmem:[%s1675 + $0x58] sm:$0xff]
    %v1688 = vld [vmem:[%s1675 + $0x60] sm:$0xff]
    %v1689 = vld [vmem:[%s1675 + $0x68] sm:$0xff]
    %v1690 = vld [vmem:[%s1675 + $0x70] sm:$0xff]
    %v1691 = vld [vmem:[%s1675 + $0x78] sm:$0xff]
    %v1692 = vsel %vm323, %v1659, 0.0
    %1693 = vadd.xlane.f32.xlu0 %v1692
    %v1694 = vpop.xlane.xlu0 %1693
    %v1695 = vsel %vm323, %v1660, 0.0
    %1696 = vadd.xlane.f32.xlu0 %v1695
    %v1697 = vpop.xlane.xlu0 %1696
    %v1698 = vsel %vm323, %v1661, 0.0
    %1699 = vadd.xlane.f32.xlu0 %v1698
    %v1700 = vpop.xlane.xlu0 %1699
    %v1701 = vsel %vm323, %v1662, 0.0
    %1702 = vadd.xlane.f32.xlu0 %v1701
    %v1703 = vpop.xlane.xlu0 %1702
    %v1704 = vsel %vm323, %v1663, 0.0
    %1705 = vadd.xlane.f32.xlu0 %v1704
    %v1706 = vpop.xlane.xlu0 %1705
    %v1707 = vsel %vm323, %v1664, 0.0
    %1708 = vadd.xlane.f32.xlu0 %v1707
    %v1709 = vpop.xlane.xlu0 %1708
    %v1710 = vsel %vm323, %v1665, 0.0
    %1711 = vadd.xlane.f32.xlu0 %v1710
    %v1712 = vpop.xlane.xlu0 %1711
    %v1713 = vsel %vm323, %v1666, 0.0
    %1714 = vadd.xlane.f32.xlu0 %v1713
    %v1715 = vpop.xlane.xlu0 %1714
    %v1716 = vmul.f32 %v1694, %v348
    %v1717 = vmul.f32 %v1697, %v348
    %v1718 = vmul.f32 %v1700, %v348
    %v1719 = vmul.f32 %v1703, %v348
    %v1720 = vmul.f32 %v1706, %v348
    %v1721 = vmul.f32 %v1709, %v348
    %v1722 = vmul.f32 %v1712, %v348
    %v1723 = vmul.f32 %v1715, %v348
    %v1724 = vsub.f32 %v1659, %v1716
    %v1725 = vsub.f32 %v1660, %v1717
    %v1726 = vsub.f32 %v1661, %v1718
    %v1727 = vsub.f32 %v1662, %v1719
    %v1728 = vsub.f32 %v1663, %v1720
    %v1729 = vsub.f32 %v1664, %v1721
    %v1730 = vsub.f32 %v1665, %v1722
    %v1731 = vsub.f32 %v1666, %v1723
    %v1732 = vmul.f32 %v1724, %v1724
    %v1733 = vmul.f32 %v1725, %v1725
    %v1734 = vmul.f32 %v1726, %v1726
    %v1735 = vmul.f32 %v1727, %v1727
    %v1736 = vmul.f32 %v1728, %v1728
    %v1737 = vmul.f32 %v1729, %v1729
    %v1738 = vmul.f32 %v1730, %v1730
    %v1739 = vmul.f32 %v1731, %v1731
    %v1740 = vsel %vm323, %v1732, 0.0
    %1741 = vadd.xlane.f32.xlu0 %v1740
    %v1742 = vpop.xlane.xlu0 %1741
    %v1743 = vsel %vm323, %v1733, 0.0
    %1744 = vadd.xlane.f32.xlu0 %v1743
    %v1745 = vpop.xlane.xlu0 %1744
    %v1746 = vsel %vm323, %v1734, 0.0
    %1747 = vadd.xlane.f32.xlu0 %v1746
    %v1748 = vpop.xlane.xlu0 %1747
    %v1749 = vsel %vm323, %v1735, 0.0
    %1750 = vadd.xlane.f32.xlu0 %v1749
    %v1751 = vpop.xlane.xlu0 %1750
    %v1752 = vsel %vm323, %v1736, 0.0
    %1753 = vadd.xlane.f32.xlu0 %v1752
    %v1754 = vpop.xlane.xlu0 %1753
    %v1755 = vsel %vm323, %v1737, 0.0
    %1756 = vadd.xlane.f32.xlu0 %v1755
    %v1757 = vpop.xlane.xlu0 %1756
    %v1758 = vsel %vm323, %v1738, 0.0
    %1759 = vadd.xlane.f32.xlu0 %v1758
    %v1760 = vpop.xlane.xlu0 %1759
    %v1761 = vsel %vm323, %v1739, 0.0
    %1762 = vadd.xlane.f32.xlu0 %v1761
    %v1763 = vpop.xlane.xlu0 %1762
    %v1764 = vmul.f32 %v1742, %v348
    %v1765 = vmul.f32 %v1745, %v348
    %v1766 = vmul.f32 %v1748, %v348
    %v1767 = vmul.f32 %v1751, %v348
    %v1768 = vmul.f32 %v1754, %v348
    %v1769 = vmul.f32 %v1757, %v348
    %v1770 = vmul.f32 %v1760, %v348
    %v1771 = vmul.f32 %v1763, %v348
    %v1772 = vadd.f32 %v1764, 1e-05
    %v1773 = vadd.f32 %v1765, 1e-05
    %v1774 = vadd.f32 %v1766, 1e-05
    %v1775 = vadd.f32 %v1767, 1e-05
    %v1776 = vadd.f32 %v1768, 1e-05
    %v1777 = vadd.f32 %v1769, 1e-05
    %v1778 = vadd.f32 %v1770, 1e-05
    %v1779 = vadd.f32 %v1771, 1e-05
    %v1780 = vrsqrt.pop %v1772
    %v1781 = vrsqrt.pop %v1773
    %v1782 = vrsqrt.pop %v1774
    %v1783 = vrsqrt.pop %v1775
    %v1784 = vrsqrt.pop %v1776
    %v1785 = vrsqrt.pop %v1777
    %v1786 = vrsqrt.pop %v1778
    %v1787 = vrsqrt.pop %v1779
    %v1788 = vmul.f32 %v1724, %v1780
    %v1789 = vmul.f32 %v1725, %v1781
    %v1790 = vmul.f32 %v1726, %v1782
    %v1791 = vmul.f32 %v1727, %v1783
    %v1792 = vmul.f32 %v1728, %v1784
    %v1793 = vmul.f32 %v1729, %v1785
    %v1794 = vmul.f32 %v1730, %v1786
    %v1795 = vmul.f32 %v1731, %v1787
    %v1796 = vlaneseq
    %v1797 = vshrl.u32 %v1796, 7
    %v1798 = vsub.s32 4, %v1797
    %v1799 = vrot.slane %v154, %v1798
    %v1800 = vmul.f32 %v1788, %v1799
    %v1801 = vmul.f32 %v1789, %v1799
    %v1802 = vmul.f32 %v1790, %v1799
    %v1803 = vmul.f32 %v1791, %v1799
    %v1804 = vmul.f32 %v1792, %v1799
    %v1805 = vmul.f32 %v1793, %v1799
    %v1806 = vmul.f32 %v1794, %v1799
    %v1807 = vmul.f32 %v1795, %v1799
    %v1808 = vlaneseq
    %v1809 = vshrl.u32 %v1808, 7
    %v1810 = vsub.s32 6, %v1809
    %v1811 = vrot.slane %v154, %v1810
    %v1812 = vadd.f32 %v1800, %v1811
    %v1813 = vadd.f32 %v1801, %v1811
    %v1814 = vadd.f32 %v1802, %v1811
    %v1815 = vadd.f32 %v1803, %v1811
    %v1816 = vadd.f32 %v1804, %v1811
    %v1817 = vadd.f32 %v1805, %v1811
    %v1818 = vadd.f32 %v1806, %v1811
    %v1819 = vadd.f32 %v1807, %v1811
    %v1820 = vpack.c.bf16 %v1813, %v1812
    %v1821 = vpack.c.bf16 %v1815, %v1814
    %v1822 = vpack.c.bf16 %v1817, %v1816
    %v1823 = vpack.c.bf16 %v1819, %v1818
    %v1824 = vlaneseq
    %v1825 = vshrl.u32 %v1824, 7
    %v1826 = vsub.s32 2, %v1825
    %v1827 = vrot.slane %v154, %v1826
    %v1832 = vunpack.c.l.b16 %v1667
    %v1833 = vunpack.c.l.b16 %v1668
    %v1834 = vunpack.c.l.b16 %v1669
    %v1835 = vunpack.c.l.b16 %v1670
    %v1836 = vpack.c.b16 %v1833, %v1832
    %v1837 = vpack.c.b16 %v1835, %v1834
    %v1841 = vsel %vm323, %v1820, 0
    %v1844 = vsel %vm323, %v1821, 0
    %v1847 = vsel %vm323, %v1822, 0
    %v1850 = vsel %vm323, %v1823, 0
    %1852 = vmatprep.subr.bf16.mxu0 0
    %1853 = vmatpush1.bf16.msra.mxu0 0
    %1854 = vmatprep.subr.bf16.mxu0 0
    %1855 = vmatpush1.bf16.msra.mxu0 0
    %1856 = vmatprep.subr.bf16.mxu0 0
    %1857 = vmatpush1.bf16.msra.mxu0 0
    %1858 = vmatprep.subr.bf16.mxu0 0
    %1859 = vmatpush1.bf16.msra.mxu0 0
    %1860 = vmatprep.subr.bf16.mxu0 0
    %1861 = vmatpush1.bf16.msra.mxu0 0
    %1862 = vmatprep.subr.bf16.mxu0 0
    %1863 = vmatpush1.bf16.msra.mxu0 0
    %1864 = vmatprep.subr.bf16.mxu0 0
    %1865 = vmatpush1.bf16.msra.mxu0 %v1837
    %1866 = vmatprep.subr.bf16.mxu0 0
    %1867 = vmatpush1.bf16.msra.mxu0 %v1836
    %1868 = vmatprep.subr.bf16.mxu0 0
    %1869 = vmatpush2.bf16.msra.mxu0 0
    %1870 = vmatprep.subr.bf16.mxu0 0
    %1871 = vmatpush2.bf16.msra.mxu0 0
    %1872 = vmatprep.subr.bf16.mxu0 0
    %1873 = vmatpush2.bf16.msra.mxu0 0
    %1874 = vmatprep.subr.bf16.mxu0 0
    %1875 = vmatpush2.bf16.msra.mxu0 0
    %1876 = vmatprep.subr.bf16.mxu0 0
    %1877 = vmatpush2.bf16.msra.mxu0 0
    %1878 = vmatprep.subr.bf16.mxu0 0
    %1879 = vmatpush2.bf16.msra.mxu0 0
    %1880 = vmatprep.subr.bf16.mxu0 0
    %1881 = vmatpush2.bf16.msra.mxu0 0
    %1882 = vmatprep.subr.bf16.mxu0 0
    %1883 = vmatpush2.bf16.msra.mxu0 0
    %1884 = vmatprep.mubr.bf16.mxu0 0
    %1885 = vmatmul.mubr.bf16.gmra.mxu0 %v1841
    %v1886 = vpop.f32.mrf.mxu0
    %v1887 = vadd.f32 %v1827, %v1886
    %v1888 = vpop.f32.mrf.mxu0
    %v1889 = vpop.f32.mrf.mxu0
    %v1890 = vadd.f32 %v1827, %v1889
    %v1891 = vpop.f32.mrf.mxu0
    %1892 = vmatprep.mubr.bf16.mxu0 0
    %1893 = vmatmul.mubr.bf16.gmra.mxu0 %v1844
    %v1894 = vpop.f32.mrf.mxu0
    %v1895 = vadd.f32 %v1827, %v1894
    %v1896 = vpop.f32.mrf.mxu0
    %v1897 = vpop.f32.mrf.mxu0
    %v1898 = vadd.f32 %v1827, %v1897
    %v1899 = vpop.f32.mrf.mxu0
    %1900 = vmatprep.mubr.bf16.mxu0 0
    %1901 = vmatmul.mubr.bf16.gmra.mxu0 %v1847
    %v1902 = vpop.f32.mrf.mxu0
    %v1903 = vadd.f32 %v1827, %v1902
    %v1904 = vpop.f32.mrf.mxu0
    %v1905 = vpop.f32.mrf.mxu0
    %v1906 = vadd.f32 %v1827, %v1905
    %v1907 = vpop.f32.mrf.mxu0
    %1908 = vmatprep.mubr.bf16.mxu0 0
    %1909 = vmatmul.mubr.bf16.gmra.mxu0 %v1850
    %v1910 = vpop.f32.mrf.mxu0
    %v1911 = vadd.f32 %v1827, %v1910
    %v1912 = vpop.f32.mrf.mxu0
    %v1913 = vpop.f32.mrf.mxu0
    %v1914 = vadd.f32 %v1827, %v1913
    %v1915 = vpop.f32.mrf.mxu0
    %1916 = vdwg.mxu0
    %v1917 = vpack.c.bf16 %v1890, %v1887
    %v1918 = vpack.c.bf16 %v1898, %v1895
    %v1919 = vpack.c.bf16 %v1906, %v1903
    %v1920 = vpack.c.bf16 %v1914, %v1911
    %1929 = vrot.lane.b32.xlu0 %v1887, 96
    %v1930 = vpop.permute.xlu0 %1929
    %1931 = vrot.lane.b32.xlu0 %v1890, 96
    %v1932 = vpop.permute.xlu0 %1931
    %1933 = vrot.lane.b32.xlu0 %v1895, 96
    %v1934 = vpop.permute.xlu0 %1933
    %1935 = vrot.lane.b32.xlu0 %v1898, 96
    %v1936 = vpop.permute.xlu0 %1935
    %1937 = vrot.lane.b32.xlu0 %v1903, 96
    %v1938 = vpop.permute.xlu0 %1937
    %1939 = vrot.lane.b32.xlu0 %v1906, 96
    %v1940 = vpop.permute.xlu0 %1939
    %1941 = vrot.lane.b32.xlu0 %v1911, 96
    %v1942 = vpop.permute.xlu0 %1941
    %1943 = vrot.lane.b32.xlu0 %v1914, 96
    %v1944 = vpop.permute.xlu0 %1943
    %1953 = vxpose.xlu0.b32.start [1/16] %v1930, 128
    %1954 = vxpose.xlu0.b32.cont [2/16] %v1932, 128
    %1955 = vxpose.xlu0.b32.cont [3/16] %v1934, 128
    %1956 = vxpose.xlu0.b32.cont [4/16] %v1936, 128
    %1957 = vxpose.xlu0.b32.cont [5/16] %v1938, 128
    %1958 = vxpose.xlu0.b32.cont [6/16] %v1940, 128
    %1959 = vxpose.xlu0.b32.cont [7/16] %v1942, 128
    %1960 = vxpose.xlu0.b32.cont [8/16] %v1944, 128
    %1961 = vxpose.xlu0.b32.cont [9/16] 0.0, 128
    %1962 = vxpose.xlu0.b32.cont [10/16] 0.0, 128
    %1963 = vxpose.xlu0.b32.cont [11/16] 0.0, 128
    %1964 = vxpose.xlu0.b32.cont [12/16] 0.0, 128
    %1965 = vxpose.xlu0.b32.cont [13/16] 0.0, 128
    %1966 = vxpose.xlu0.b32.cont [14/16] 0.0, 128
    %1967 = vxpose.xlu0.b32.cont [15/16] 0.0, 128
    %1968 = vxpose.xlu0.b32.end [16/16] 0.0, 128
    %v1969 = vpop.trf.xlu0
    %v1970 = vpop.trf.xlu0
    %v1971 = vpop.trf.xlu0
    %v1972 = vpop.trf.xlu0
    %v1973 = vpop.trf.xlu0
    %v1974 = vpop.trf.xlu0
    %v1975 = vpop.trf.xlu0
    %v1976 = vpop.trf.xlu0
    %v1977 = vpop.trf.xlu0
    %v1978 = vpop.trf.xlu0
    %v1979 = vpop.trf.xlu0
    %v1980 = vpop.trf.xlu0
    %v1981 = vpop.trf.xlu0
    %v1982 = vpop.trf.xlu0
    %v1983 = vpop.trf.xlu0
    %v1984 = vpop.trf.xlu0
    %1989 = vrot.lane.b32.xlu0 %v1969, 64
    %v1990 = vpop.permute.xlu0 %1989
    %1991 = vrot.lane.b32.xlu0 %v1970, 64
    %v1992 = vpop.permute.xlu0 %1991
    %1993 = vrot.lane.b32.xlu0 %v1971, 64
    %v1994 = vpop.permute.xlu0 %1993
    %1995 = vrot.lane.b32.xlu0 %v1972, 64
    %v1996 = vpop.permute.xlu0 %1995
    %v2001 = vsel %vm220, %v1969, %v1990
    %v2002 = vsel %vm220, %v1970, %v1992
    %v2003 = vsel %vm220, %v1971, %v1994
    %v2004 = vsel %vm220, %v1972, %v1996
    %v2005 = vmul.f32 %v2001, %v114
    %v2006 = vmul.f32 %v2001, %v115
    %v2007 = vmul.f32 %v2002, %v116
    %v2008 = vmul.f32 %v2002, %v117
    %v2009 = vmul.f32 %v2003, %v118
    %v2010 = vmul.f32 %v2003, %v119
    %v2011 = vmul.f32 %v2004, %v120
    %v2012 = vmul.f32 %v2004, %v121
    %v2013 = vpack.c.bf16 %v2007, %v2005
    %v2014 = vpack.c.bf16 %v2008, %v2006
    %v2015 = vpack.c.bf16 %v2011, %v2009
    %v2016 = vpack.c.bf16 %v2012, %v2010
    %v2018 = vsel %vm323, %v1917, 0
    %v2021 = vsel %vm323, %v1918, 0
    %v2024 = vsel %vm323, %v1919, 0
    %v2027 = vsel %vm323, %v1920, 0
    %2029 = vmatprep.subr.bf16.mxu0 0
    %2030 = vmatpush1.bf16.msra.mxu0 0
    %2031 = vmatprep.subr.bf16.mxu0 0
    %2032 = vmatpush1.bf16.msra.mxu0 0
    %2033 = vmatprep.subr.bf16.mxu0 0
    %2034 = vmatpush1.bf16.msra.mxu0 0
    %2035 = vmatprep.subr.bf16.mxu0 0
    %2036 = vmatpush1.bf16.msra.mxu0 0
    %2037 = vmatprep.subr.bf16.mxu0 0
    %2038 = vmatpush1.bf16.msra.mxu0 0
    %2039 = vmatprep.subr.bf16.mxu0 0
    %2040 = vmatpush1.bf16.msra.mxu0 0
    %2041 = vmatprep.subr.bf16.mxu0 %v2016
    %2042 = vmatpush1.bf16.msra.mxu0 %v2015
    %2043 = vmatprep.subr.bf16.mxu0 %v2014
    %2044 = vmatpush1.bf16.msra.mxu0 %v2013
    %2045 = vmatprep.subr.bf16.mxu0 0
    %2046 = vmatpush2.bf16.msra.mxu0 0
    %2047 = vmatprep.subr.bf16.mxu0 0
    %2048 = vmatpush2.bf16.msra.mxu0 0
    %2049 = vmatprep.subr.bf16.mxu0 0
    %2050 = vmatpush2.bf16.msra.mxu0 0
    %2051 = vmatprep.subr.bf16.mxu0 0
    %2052 = vmatpush2.bf16.msra.mxu0 0
    %2053 = vmatprep.subr.bf16.mxu0 0
    %2054 = vmatpush2.bf16.msra.mxu0 0
    %2055 = vmatprep.subr.bf16.mxu0 0
    %2056 = vmatpush2.bf16.msra.mxu0 0
    %2057 = vmatprep.subr.bf16.mxu0 0
    %2058 = vmatpush2.bf16.msra.mxu0 0
    %2059 = vmatprep.subr.bf16.mxu0 0
    %2060 = vmatpush2.bf16.msra.mxu0 0
    %2061 = vmatprep.mubr.bf16.mxu0 0
    %2062 = vmatmul.mubr.bf16.gmra.mxu0 %v2018
    %v2063 = vpop.f32.mrf.mxu0
    %v2064 = vadd.f32 %v1676, %v2063
    %v2065 = vpop.f32.mrf.mxu0
    %v2066 = vadd.f32 %v1677, %v2065
    %v2067 = vpop.f32.mrf.mxu0
    %v2068 = vadd.f32 %v1678, %v2067
    %v2069 = vpop.f32.mrf.mxu0
    %v2070 = vadd.f32 %v1679, %v2069
    %2071 = vmatprep.mubr.bf16.mxu0 0
    %2072 = vmatmul.mubr.bf16.gmra.mxu0 %v2021
    %v2073 = vpop.f32.mrf.mxu0
    %v2074 = vadd.f32 %v1680, %v2073
    %v2075 = vpop.f32.mrf.mxu0
    %v2076 = vadd.f32 %v1681, %v2075
    %v2077 = vpop.f32.mrf.mxu0
    %v2078 = vadd.f32 %v1682, %v2077
    %v2079 = vpop.f32.mrf.mxu0
    %v2080 = vadd.f32 %v1683, %v2079
    %2081 = vmatprep.mubr.bf16.mxu0 0
    %2082 = vmatmul.mubr.bf16.gmra.mxu0 %v2024
    %v2083 = vpop.f32.mrf.mxu0
    %v2084 = vadd.f32 %v1684, %v2083
    %v2085 = vpop.f32.mrf.mxu0
    %v2086 = vadd.f32 %v1685, %v2085
    %v2087 = vpop.f32.mrf.mxu0
    %v2088 = vadd.f32 %v1686, %v2087
    %v2089 = vpop.f32.mrf.mxu0
    %v2090 = vadd.f32 %v1687, %v2089
    %2091 = vmatprep.mubr.bf16.mxu0 0
    %2092 = vmatmul.mubr.bf16.gmra.mxu0 %v2027
    %v2093 = vpop.f32.mrf.mxu0
    %v2094 = vadd.f32 %v1688, %v2093
    %v2095 = vpop.f32.mrf.mxu0
    %v2096 = vadd.f32 %v1689, %v2095
    %v2097 = vpop.f32.mrf.mxu0
    %v2098 = vadd.f32 %v1690, %v2097
    %v2099 = vpop.f32.mrf.mxu0
    %v2100 = vadd.f32 %v1691, %v2099
    %2101 = vdwg.mxu0
    %v2102 = vmax.f32 %v2064, %v2066
    %2103 = vmax.xlane.f32.xlu0 %v2102
    %v2104 = vpop.xlane.xlu0 %2103
    %v2105 = vmax.f32 %v2068, %v2070
    %2106 = vmax.xlane.f32.xlu0 %v2105
    %v2107 = vpop.xlane.xlu0 %2106
    %v2108 = vmax.f32 %v2074, %v2076
    %2109 = vmax.xlane.f32.xlu0 %v2108
    %v2110 = vpop.xlane.xlu0 %2109
    %v2111 = vmax.f32 %v2078, %v2080
    %2112 = vmax.xlane.f32.xlu0 %v2111
    %v2113 = vpop.xlane.xlu0 %2112
    %v2114 = vmax.f32 %v2084, %v2086
    %2115 = vmax.xlane.f32.xlu0 %v2114
    %v2116 = vpop.xlane.xlu0 %2115
    %v2117 = vmax.f32 %v2088, %v2090
    %2118 = vmax.xlane.f32.xlu0 %v2117
    %v2119 = vpop.xlane.xlu0 %2118
    %v2120 = vmax.f32 %v2094, %v2096
    %2121 = vmax.xlane.f32.xlu0 %v2120
    %v2122 = vpop.xlane.xlu0 %2121
    %v2123 = vmax.f32 %v2098, %v2100
    %2124 = vmax.xlane.f32.xlu0 %v2123
    %v2125 = vpop.xlane.xlu0 %2124
    %v2126 = vsub.f32 %v2064, %v2104
    %v2127 = vsub.f32 %v2066, %v2104
    %v2128 = vsub.f32 %v2068, %v2107
    %v2129 = vsub.f32 %v2070, %v2107
    %v2130 = vsub.f32 %v2074, %v2110
    %v2131 = vsub.f32 %v2076, %v2110
    %v2132 = vsub.f32 %v2078, %v2113
    %v2133 = vsub.f32 %v2080, %v2113
    %v2134 = vsub.f32 %v2084, %v2116
    %v2135 = vsub.f32 %v2086, %v2116
    %v2136 = vsub.f32 %v2088, %v2119
    %v2137 = vsub.f32 %v2090, %v2119
    %v2138 = vsub.f32 %v2094, %v2122
    %v2139 = vsub.f32 %v2096, %v2122
    %v2140 = vsub.f32 %v2098, %v2125
    %v2141 = vsub.f32 %v2100, %v2125
    %v2142 = vmul.f32 %v2126, 1.442695
    %v2143 = vpow.pop %v2142
    %v2144 = vmul.f32 %v2127, 1.442695
    %v2145 = vpow.pop %v2144
    %v2146 = vmul.f32 %v2128, 1.442695
    %v2147 = vpow.pop %v2146
    %v2148 = vmul.f32 %v2129, 1.442695
    %v2149 = vpow.pop %v2148
    %v2150 = vmul.f32 %v2130, 1.442695
    %v2151 = vpow.pop %v2150
    %v2152 = vmul.f32 %v2131, 1.442695
    %v2153 = vpow.pop %v2152
    %v2154 = vmul.f32 %v2132, 1.442695
    %v2155 = vpow.pop %v2154
    %v2156 = vmul.f32 %v2133, 1.442695
    %v2157 = vpow.pop %v2156
    %v2158 = vmul.f32 %v2134, 1.442695
    %v2159 = vpow.pop %v2158
    %v2160 = vmul.f32 %v2135, 1.442695
    %v2161 = vpow.pop %v2160
    %v2162 = vmul.f32 %v2136, 1.442695
    %v2163 = vpow.pop %v2162
    %v2164 = vmul.f32 %v2137, 1.442695
    %v2165 = vpow.pop %v2164
    %v2166 = vmul.f32 %v2138, 1.442695
    %v2167 = vpow.pop %v2166
    %v2168 = vmul.f32 %v2139, 1.442695
    %v2169 = vpow.pop %v2168
    %v2170 = vmul.f32 %v2140, 1.442695
    %v2171 = vpow.pop %v2170
    %v2172 = vmul.f32 %v2141, 1.442695
    %v2173 = vpow.pop %v2172
    %v2174 = vmul.f32 %v2143, %v66
    %v2175 = vmul.f32 %v2145, %v67
    %v2176 = vmul.f32 %v2147, %v68
    %v2177 = vmul.f32 %v2149, %v69
    %v2178 = vmul.f32 %v2151, %v70
    %v2179 = vmul.f32 %v2153, %v71
    %v2180 = vmul.f32 %v2155, %v72
    %v2181 = vmul.f32 %v2157, %v73
    %v2182 = vmul.f32 %v2159, %v74
    %v2183 = vmul.f32 %v2161, %v75
    %v2184 = vmul.f32 %v2163, %v76
    %v2185 = vmul.f32 %v2165, %v77
    %v2186 = vmul.f32 %v2167, %v78
    %v2187 = vmul.f32 %v2169, %v79
    %v2188 = vmul.f32 %v2171, %v80
    %v2189 = vmul.f32 %v2173, %v81
    %v2190 = vpack.c.bf16 %v2176, %v2174
    %v2191 = vpack.c.bf16 %v2177, %v2175
    %v2192 = vpack.c.bf16 %v2180, %v2178
    %v2193 = vpack.c.bf16 %v2181, %v2179
    %v2194 = vpack.c.bf16 %v2184, %v2182
    %v2195 = vpack.c.bf16 %v2185, %v2183
    %v2196 = vpack.c.bf16 %v2188, %v2186
    %v2197 = vpack.c.bf16 %v2189, %v2187
    %2198 = vmatprep.subr.bf16.mxu0 0
    %2199 = vmatpush1.bf16.msra.mxu0 %v902
    %2200 = vmatprep.subr.bf16.mxu0 0
    %2201 = vmatpush1.bf16.msra.mxu0 %v901
    %2202 = vmatprep.subr.bf16.mxu0 0
    %2203 = vmatpush1.bf16.msra.mxu0 %v900
    %2204 = vmatprep.subr.bf16.mxu0 0
    %2205 = vmatpush1.bf16.msra.mxu0 %v899
    %2206 = vmatprep.subr.bf16.mxu0 0
    %2207 = vmatpush1.bf16.msra.mxu0 %v898
    %2208 = vmatprep.subr.bf16.mxu0 0
    %2209 = vmatpush1.bf16.msra.mxu0 %v897
    %2210 = vmatprep.subr.bf16.mxu0 0
    %2211 = vmatpush1.bf16.msra.mxu0 %v896
    %2212 = vmatprep.subr.bf16.mxu0 0
    %2213 = vmatpush1.bf16.msra.mxu0 %v895
    %2214 = vmatprep.subr.bf16.mxu0 0
    %2215 = vmatpush2.bf16.msra.mxu0 %v910
    %2216 = vmatprep.subr.bf16.mxu0 0
    %2217 = vmatpush2.bf16.msra.mxu0 %v909
    %2218 = vmatprep.subr.bf16.mxu0 0
    %2219 = vmatpush2.bf16.msra.mxu0 %v908
    %2220 = vmatprep.subr.bf16.mxu0 0
    %2221 = vmatpush2.bf16.msra.mxu0 %v907
    %2222 = vmatprep.subr.bf16.mxu0 0
    %2223 = vmatpush2.bf16.msra.mxu0 %v906
    %2224 = vmatprep.subr.bf16.mxu0 0
    %2225 = vmatpush2.bf16.msra.mxu0 %v905
    %2226 = vmatprep.subr.bf16.mxu0 0
    %2227 = vmatpush2.bf16.msra.mxu0 %v904
    %2228 = vmatprep.subr.bf16.mxu0 0
    %2229 = vmatpush2.bf16.msra.mxu0 %v903
    %2230 = vmatprep.mubr.bf16.mxu0 %v2191
    %2231 = vmatmul.mubr.bf16.gmra.mxu0 %v2190
    %v2232 = vpop.f32.mrf.mxu0
    %v2233 = vadd.f32 0.0, %v2232
    %v2234 = vpop.f32.mrf.mxu0
    %v2235 = vpop.f32.mrf.mxu0
    %v2236 = vadd.f32 0.0, %v2235
    %v2237 = vpop.f32.mrf.mxu0
    %2238 = vmatprep.mubr.bf16.mxu0 %v2193
    %2239 = vmatmul.mubr.bf16.gmra.mxu0 %v2192
    %v2240 = vpop.f32.mrf.mxu0
    %v2241 = vadd.f32 0.0, %v2240
    %v2242 = vpop.f32.mrf.mxu0
    %v2243 = vpop.f32.mrf.mxu0
    %v2244 = vadd.f32 0.0, %v2243
    %v2245 = vpop.f32.mrf.mxu0
    %2246 = vmatprep.mubr.bf16.mxu0 %v2195
    %2247 = vmatmul.mubr.bf16.gmra.mxu0 %v2194
    %v2248 = vpop.f32.mrf.mxu0
    %v2249 = vadd.f32 0.0, %v2248
    %v2250 = vpop.f32.mrf.mxu0
    %v2251 = vpop.f32.mrf.mxu0
    %v2252 = vadd.f32 0.0, %v2251
    %v2253 = vpop.f32.mrf.mxu0
    %2254 = vmatprep.mubr.bf16.mxu0 %v2197
    %2255 = vmatmul.mubr.bf16.gmra.mxu0 %v2196
    %v2256 = vpop.f32.mrf.mxu0
    %v2257 = vadd.f32 0.0, %v2256
    %v2258 = vpop.f32.mrf.mxu0
    %v2259 = vpop.f32.mrf.mxu0
    %v2260 = vadd.f32 0.0, %v2259
    %v2261 = vpop.f32.mrf.mxu0
    %2262 = vdwg.mxu0
    %v2263 = vmax.f32 %v2233, 1e-30
    %v2264 = vmax.f32 %v2236, 1e-30
    %v2265 = vmax.f32 %v2241, 1e-30
    %v2266 = vmax.f32 %v2244, 1e-30
    %v2267 = vmax.f32 %v2249, 1e-30
    %v2268 = vmax.f32 %v2252, 1e-30
    %v2269 = vmax.f32 %v2257, 1e-30
    %v2270 = vmax.f32 %v2260, 1e-30
    %v2271 = vrcp.pop %v2263
    %v2272 = vrcp.pop %v2264
    %v2273 = vrcp.pop %v2265
    %v2274 = vrcp.pop %v2266
    %v2275 = vrcp.pop %v2267
    %v2276 = vrcp.pop %v2268
    %v2277 = vrcp.pop %v2269
    %v2278 = vrcp.pop %v2270
    %v2279 = vpack.c.bf16 %v2272, %v2271
    %v2280 = vpack.c.bf16 %v2274, %v2273
    %v2281 = vpack.c.bf16 %v2276, %v2275
    %v2282 = vpack.c.bf16 %v2278, %v2277
    %v2284 = vsel %vm323, %v2279, 0
    %v2287 = vsel %vm323, %v2280, 0
    %v2290 = vsel %vm323, %v2281, 0
    %v2293 = vsel %vm323, %v2282, 0
    %2295 = vmatprep.subr.bf16.mxu0 0
    %2296 = vmatpush1.bf16.xpose.msra.mxu0 %v1046
    %2297 = vmatprep.subr.bf16.mxu0 0
    %2298 = vmatpush1.bf16.xpose.msra.mxu0 %v1043
    %2299 = vmatprep.subr.bf16.mxu0 0
    %2300 = vmatpush1.bf16.xpose.msra.mxu0 %v1040
    %2301 = vmatprep.subr.bf16.mxu0 0
    %2302 = vmatpush1.bf16.xpose.msra.mxu0 %v1037
    %2303 = vmatprep.subr.bf16.mxu0 0
    %2304 = vmatpush1.bf16.xpose.msra.mxu0 %v1034
    %2305 = vmatprep.subr.bf16.mxu0 0
    %2306 = vmatpush1.bf16.xpose.msra.mxu0 %v1031
    %2307 = vmatprep.subr.bf16.mxu0 0
    %2308 = vmatpush1.bf16.xpose.msra.mxu0 %v1028
    %2309 = vmatprep.subr.bf16.mxu0 0
    %2310 = vmatpush1.bf16.xpose.msra.mxu0 %v1025
    %2311 = vmatprep.subr.bf16.mxu0 0
    %2312 = vmatpush2.bf16.xpose.msra.mxu0 %v1070
    %2313 = vmatprep.subr.bf16.mxu0 0
    %2314 = vmatpush2.bf16.xpose.msra.mxu0 %v1067
    %2315 = vmatprep.subr.bf16.mxu0 0
    %2316 = vmatpush2.bf16.xpose.msra.mxu0 %v1064
    %2317 = vmatprep.subr.bf16.mxu0 0
    %2318 = vmatpush2.bf16.xpose.msra.mxu0 %v1061
    %2319 = vmatprep.subr.bf16.mxu0 0
    %2320 = vmatpush2.bf16.xpose.msra.mxu0 %v1058
    %2321 = vmatprep.subr.bf16.mxu0 0
    %2322 = vmatpush2.bf16.xpose.msra.mxu0 %v1055
    %2323 = vmatprep.subr.bf16.mxu0 0
    %2324 = vmatpush2.bf16.xpose.msra.mxu0 %v1052
    %2325 = vmatprep.subr.bf16.mxu0 0
    %2326 = vmatpush2.bf16.xpose.msra.mxu0 %v1049
    %2327 = vmatprep.mubr.bf16.mxu0 0
    %2328 = vmatmul.mubr.bf16.gmra.mxu0 %v2284
    %v2329 = vpop.f32.mrf.mxu0
    %v2330 = vadd.f32 0.0, %v2329
    %v2331 = vpop.f32.mrf.mxu0
    %v2332 = vadd.f32 0.0, %v2331
    %v2333 = vpop.f32.mrf.mxu0
    %v2334 = vadd.f32 0.0, %v2333
    %v2335 = vpop.f32.mrf.mxu0
    %v2336 = vadd.f32 0.0, %v2335
    %2337 = vmatprep.mubr.bf16.mxu0 0
    %2338 = vmatmul.mubr.bf16.gmra.mxu0 %v2287
    %v2339 = vpop.f32.mrf.mxu0
    %v2340 = vadd.f32 0.0, %v2339
    %v2341 = vpop.f32.mrf.mxu0
    %v2342 = vadd.f32 0.0, %v2341
    %v2343 = vpop.f32.mrf.mxu0
    %v2344 = vadd.f32 0.0, %v2343
    %v2345 = vpop.f32.mrf.mxu0
    %v2346 = vadd.f32 0.0, %v2345
    %2347 = vmatprep.mubr.bf16.mxu0 0
    %2348 = vmatmul.mubr.bf16.gmra.mxu0 %v2290
    %v2349 = vpop.f32.mrf.mxu0
    %v2350 = vadd.f32 0.0, %v2349
    %v2351 = vpop.f32.mrf.mxu0
    %v2352 = vadd.f32 0.0, %v2351
    %v2353 = vpop.f32.mrf.mxu0
    %v2354 = vadd.f32 0.0, %v2353
    %v2355 = vpop.f32.mrf.mxu0
    %v2356 = vadd.f32 0.0, %v2355
    %2357 = vmatprep.mubr.bf16.mxu0 0
    %2358 = vmatmul.mubr.bf16.gmra.mxu0 %v2293
    %v2359 = vpop.f32.mrf.mxu0
    %v2360 = vadd.f32 0.0, %v2359
    %v2361 = vpop.f32.mrf.mxu0
    %v2362 = vadd.f32 0.0, %v2361
    %v2363 = vpop.f32.mrf.mxu0
    %v2364 = vadd.f32 0.0, %v2363
    %v2365 = vpop.f32.mrf.mxu0
    %v2366 = vadd.f32 0.0, %v2365
    %2367 = vdwg.mxu0
    %v2368 = vmul.f32 %v2174, %v2330
    %v2369 = vmul.f32 %v2175, %v2332
    %v2370 = vmul.f32 %v2176, %v2334
    %v2371 = vmul.f32 %v2177, %v2336
    %v2372 = vmul.f32 %v2178, %v2340
    %v2373 = vmul.f32 %v2179, %v2342
    %v2374 = vmul.f32 %v2180, %v2344
    %v2375 = vmul.f32 %v2181, %v2346
    %v2376 = vmul.f32 %v2182, %v2350
    %v2377 = vmul.f32 %v2183, %v2352
    %v2378 = vmul.f32 %v2184, %v2354
    %v2379 = vmul.f32 %v2185, %v2356
    %v2380 = vmul.f32 %v2186, %v2360
    %v2381 = vmul.f32 %v2187, %v2362
    %v2382 = vmul.f32 %v2188, %v2364
    %v2383 = vmul.f32 %v2189, %v2366
    %v2384 = vpack.c.bf16 %v2370, %v2368
    %v2385 = vpack.c.bf16 %v2371, %v2369
    %v2386 = vpack.c.bf16 %v2374, %v2372
    %v2387 = vpack.c.bf16 %v2375, %v2373
    %v2388 = vpack.c.bf16 %v2378, %v2376
    %v2389 = vpack.c.bf16 %v2379, %v2377
    %v2390 = vpack.c.bf16 %v2382, %v2380
    %v2391 = vpack.c.bf16 %v2383, %v2381
    %v2392 = vmul.f32 %v1887, %v1202
    %v2393 = vmul.f32 %v1890, %v1204
    %v2394 = vmul.f32 %v1895, %v1206
    %v2395 = vmul.f32 %v1898, %v1208
    %v2396 = vmul.f32 %v1903, %v1210
    %v2397 = vmul.f32 %v1906, %v1212
    %v2398 = vmul.f32 %v1911, %v1214
    %v2399 = vmul.f32 %v1914, %v1216
    %v2400 = vmul.f32 %v1887, %v1218
    %v2401 = vmul.f32 %v1890, %v1220
    %v2402 = vmul.f32 %v1895, %v1222
    %v2403 = vmul.f32 %v1898, %v1224
    %v2404 = vmul.f32 %v1903, %v1226
    %v2405 = vmul.f32 %v1906, %v1228
    %v2406 = vmul.f32 %v1911, %v1230
    %v2407 = vmul.f32 %v1914, %v1232
    %v2408 = vmul.f32 %v1887, %v1234
    %v2409 = vmul.f32 %v1890, %v1236
    %v2410 = vmul.f32 %v1895, %v1238
    %v2411 = vmul.f32 %v1898, %v1240
    %v2412 = vmul.f32 %v1903, %v1242
    %v2413 = vmul.f32 %v1906, %v1244
    %v2414 = vmul.f32 %v1911, %v1246
    %v2415 = vmul.f32 %v1914, %v1248
    %v2416 = vmul.f32 %v1887, %v1250
    %v2417 = vmul.f32 %v1890, %v1252
    %v2418 = vmul.f32 %v1895, %v1254
    %v2419 = vmul.f32 %v1898, %v1256
    %v2420 = vmul.f32 %v1903, %v1258
    %v2421 = vmul.f32 %v1906, %v1260
    %v2422 = vmul.f32 %v1911, %v1262
    %v2423 = vmul.f32 %v1914, %v1264
    %v2424 = vpack.c.bf16 %v2393, %v2392
    %v2425 = vpack.c.bf16 %v2395, %v2394
    %v2426 = vpack.c.bf16 %v2397, %v2396
    %v2427 = vpack.c.bf16 %v2399, %v2398
    %v2428 = vpack.c.bf16 %v2401, %v2400
    %v2429 = vpack.c.bf16 %v2403, %v2402
    %v2430 = vpack.c.bf16 %v2405, %v2404
    %v2431 = vpack.c.bf16 %v2407, %v2406
    %v2432 = vpack.c.bf16 %v2409, %v2408
    %v2433 = vpack.c.bf16 %v2411, %v2410
    %v2434 = vpack.c.bf16 %v2413, %v2412
    %v2435 = vpack.c.bf16 %v2415, %v2414
    %v2436 = vpack.c.bf16 %v2417, %v2416
    %v2437 = vpack.c.bf16 %v2419, %v2418
    %v2438 = vpack.c.bf16 %v2421, %v2420
    %v2439 = vpack.c.bf16 %v2423, %v2422
    %2456 = vrot.lane.b32.xlu0 %v2424, 64
    %v2457 = vpop.permute.xlu0 %2456
    %2458 = vrot.lane.b32.xlu0 %v2425, 64
    %v2459 = vpop.permute.xlu0 %2458
    %2460 = vrot.lane.b32.xlu0 %v2426, 64
    %v2461 = vpop.permute.xlu0 %2460
    %2462 = vrot.lane.b32.xlu0 %v2427, 64
    %v2463 = vpop.permute.xlu0 %2462
    %2464 = vrot.lane.b32.xlu0 %v2428, 64
    %v2465 = vpop.permute.xlu0 %2464
    %2466 = vrot.lane.b32.xlu0 %v2429, 64
    %v2467 = vpop.permute.xlu0 %2466
    %2468 = vrot.lane.b32.xlu0 %v2430, 64
    %v2469 = vpop.permute.xlu0 %2468
    %2470 = vrot.lane.b32.xlu0 %v2431, 64
    %v2471 = vpop.permute.xlu0 %2470
    %2472 = vrot.lane.b32.xlu0 %v2432, 64
    %v2473 = vpop.permute.xlu0 %2472
    %2474 = vrot.lane.b32.xlu0 %v2433, 64
    %v2475 = vpop.permute.xlu0 %2474
    %2476 = vrot.lane.b32.xlu0 %v2434, 64
    %v2477 = vpop.permute.xlu0 %2476
    %2478 = vrot.lane.b32.xlu0 %v2435, 64
    %v2479 = vpop.permute.xlu0 %2478
    %2480 = vrot.lane.b32.xlu0 %v2436, 64
    %v2481 = vpop.permute.xlu0 %2480
    %2482 = vrot.lane.b32.xlu0 %v2437, 64
    %v2483 = vpop.permute.xlu0 %2482
    %2484 = vrot.lane.b32.xlu0 %v2438, 64
    %v2485 = vpop.permute.xlu0 %2484
    %2486 = vrot.lane.b32.xlu0 %v2439, 64
    %v2487 = vpop.permute.xlu0 %2486
    %2504 = vmatprep.subr.bf16.mxu0 0
    %2505 = vmatpush1.bf16.msra.mxu0 %v2471
    %2506 = vmatprep.subr.bf16.mxu0 0
    %2507 = vmatpush1.bf16.msra.mxu0 %v2469
    %2508 = vmatprep.subr.bf16.mxu0 0
    %2509 = vmatpush1.bf16.msra.mxu0 %v2467
    %2510 = vmatprep.subr.bf16.mxu0 0
    %2511 = vmatpush1.bf16.msra.mxu0 %v2465
    %2512 = vmatprep.subr.bf16.mxu0 0
    %2513 = vmatpush1.bf16.msra.mxu0 %v2463
    %2514 = vmatprep.subr.bf16.mxu0 0
    %2515 = vmatpush1.bf16.msra.mxu0 %v2461
    %2516 = vmatprep.subr.bf16.mxu0 0
    %2517 = vmatpush1.bf16.msra.mxu0 %v2459
    %2518 = vmatprep.subr.bf16.mxu0 0
    %2519 = vmatpush1.bf16.msra.mxu0 %v2457
    %2520 = vmatprep.subr.bf16.mxu0 0
    %2521 = vmatpush2.bf16.msra.mxu0 %v2487
    %2522 = vmatprep.subr.bf16.mxu0 0
    %2523 = vmatpush2.bf16.msra.mxu0 %v2485
    %2524 = vmatprep.subr.bf16.mxu0 0
    %2525 = vmatpush2.bf16.msra.mxu0 %v2483
    %2526 = vmatprep.subr.bf16.mxu0 0
    %2527 = vmatpush2.bf16.msra.mxu0 %v2481
    %2528 = vmatprep.subr.bf16.mxu0 0
    %2529 = vmatpush2.bf16.msra.mxu0 %v2479
    %2530 = vmatprep.subr.bf16.mxu0 0
    %2531 = vmatpush2.bf16.msra.mxu0 %v2477
    %2532 = vmatprep.subr.bf16.mxu0 0
    %2533 = vmatpush2.bf16.msra.mxu0 %v2475
    %2534 = vmatprep.subr.bf16.mxu0 0
    %2535 = vmatpush2.bf16.msra.mxu0 %v2473
    %2536 = vmatprep.mubr.bf16.mxu0 %v2385
    %2537 = vmatmul.mubr.bf16.gmra.mxu0 %v2384
    %v2538 = vpop.f32.mrf.mxu0
    %v2539 = vadd.f32 0.0, %v2538
    %v2540 = vpop.f32.mrf.mxu0
    %v2541 = vpop.f32.mrf.mxu0
    %v2542 = vadd.f32 0.0, %v2541
    %v2543 = vpop.f32.mrf.mxu0
    %2544 = vmatprep.mubr.bf16.mxu0 %v2387
    %2545 = vmatmul.mubr.bf16.gmra.mxu0 %v2386
    %v2546 = vpop.f32.mrf.mxu0
    %v2547 = vadd.f32 0.0, %v2546
    %v2548 = vpop.f32.mrf.mxu0
    %v2549 = vpop.f32.mrf.mxu0
    %v2550 = vadd.f32 0.0, %v2549
    %v2551 = vpop.f32.mrf.mxu0
    %2552 = vmatprep.mubr.bf16.mxu0 %v2389
    %2553 = vmatmul.mubr.bf16.gmra.mxu0 %v2388
    %v2554 = vpop.f32.mrf.mxu0
    %v2555 = vadd.f32 0.0, %v2554
    %v2556 = vpop.f32.mrf.mxu0
    %v2557 = vpop.f32.mrf.mxu0
    %v2558 = vadd.f32 0.0, %v2557
    %v2559 = vpop.f32.mrf.mxu0
    %2560 = vmatprep.mubr.bf16.mxu0 %v2391
    %2561 = vmatmul.mubr.bf16.gmra.mxu0 %v2390
    %v2562 = vpop.f32.mrf.mxu0
    %v2563 = vadd.f32 0.0, %v2562
    %v2564 = vpop.f32.mrf.mxu0
    %v2565 = vpop.f32.mrf.mxu0
    %v2566 = vadd.f32 0.0, %v2565
    %v2567 = vpop.f32.mrf.mxu0
    %2568 = vdwg.mxu0
    %v2569 = vpack.c.bf16 %v2542, %v2539
    %v2570 = vpack.c.bf16 %v2550, %v2547
    %v2571 = vpack.c.bf16 %v2558, %v2555
    %v2572 = vpack.c.bf16 %v2566, %v2563
    %v2573 = vlaneseq
    %v2574 = vshrl.u32 %v2573, 7
    %v2575 = vsub.s32 0, %v2574
    %v2576 = vrot.slane %v155, %v2575
    %v2581 = vunpack.c.l.b16 %v1671
    %v2582 = vunpack.c.l.b16 %v1672
    %v2583 = vunpack.c.l.b16 %v1673
    %v2584 = vunpack.c.l.b16 %v1674
    %v2585 = vpack.c.b16 %v2582, %v2581
    %v2586 = vpack.c.b16 %v2584, %v2583
    %v2590 = vsel %vm323, %v2569, 0
    %v2593 = vsel %vm323, %v2570, 0
    %v2596 = vsel %vm323, %v2571, 0
    %v2599 = vsel %vm323, %v2572, 0
    %2601 = vmatprep.subr.bf16.mxu0 0
    %2602 = vmatpush1.bf16.msra.mxu0 0
    %2603 = vmatprep.subr.bf16.mxu0 0
    %2604 = vmatpush1.bf16.msra.mxu0 0
    %2605 = vmatprep.subr.bf16.mxu0 0
    %2606 = vmatpush1.bf16.msra.mxu0 0
    %2607 = vmatprep.subr.bf16.mxu0 0
    %2608 = vmatpush1.bf16.msra.mxu0 0
    %2609 = vmatprep.subr.bf16.mxu0 0
    %2610 = vmatpush1.bf16.msra.mxu0 0
    %2611 = vmatprep.subr.bf16.mxu0 0
    %2612 = vmatpush1.bf16.msra.mxu0 0
    %2613 = vmatprep.subr.bf16.mxu0 0
    %2614 = vmatpush1.bf16.msra.mxu0 %v2586
    %2615 = vmatprep.subr.bf16.mxu0 0
    %2616 = vmatpush1.bf16.msra.mxu0 %v2585
    %2617 = vmatprep.subr.bf16.mxu0 0
    %2618 = vmatpush2.bf16.msra.mxu0 0
    %2619 = vmatprep.subr.bf16.mxu0 0
    %2620 = vmatpush2.bf16.msra.mxu0 0
    %2621 = vmatprep.subr.bf16.mxu0 0
    %2622 = vmatpush2.bf16.msra.mxu0 0
    %2623 = vmatprep.subr.bf16.mxu0 0
    %2624 = vmatpush2.bf16.msra.mxu0 0
    %2625 = vmatprep.subr.bf16.mxu0 0
    %2626 = vmatpush2.bf16.msra.mxu0 0
    %2627 = vmatprep.subr.bf16.mxu0 0
    %2628 = vmatpush2.bf16.msra.mxu0 0
    %2629 = vmatprep.subr.bf16.mxu0 0
    %2630 = vmatpush2.bf16.msra.mxu0 0
    %2631 = vmatprep.subr.bf16.mxu0 0
    %2632 = vmatpush2.bf16.msra.mxu0 0
    %2633 = vmatprep.mubr.bf16.mxu0 0
    %2634 = vmatmul.mubr.bf16.gmra.mxu0 %v2590
    %v2635 = vpop.f32.mrf.mxu0
    %v2636 = vadd.f32 %v2576, %v2635
    %v2637 = vpop.f32.mrf.mxu0
    %v2638 = vpop.f32.mrf.mxu0
    %v2639 = vadd.f32 %v2576, %v2638
    %v2640 = vpop.f32.mrf.mxu0
    %2641 = vmatprep.mubr.bf16.mxu0 0
    %2642 = vmatmul.mubr.bf16.gmra.mxu0 %v2593
    %v2643 = vpop.f32.mrf.mxu0
    %v2644 = vadd.f32 %v2576, %v2643
    %v2645 = vpop.f32.mrf.mxu0
    %v2646 = vpop.f32.mrf.mxu0
    %v2647 = vadd.f32 %v2576, %v2646
    %v2648 = vpop.f32.mrf.mxu0
    %2649 = vmatprep.mubr.bf16.mxu0 0
    %2650 = vmatmul.mubr.bf16.gmra.mxu0 %v2596
    %v2651 = vpop.f32.mrf.mxu0
    %v2652 = vadd.f32 %v2576, %v2651
    %v2653 = vpop.f32.mrf.mxu0
    %v2654 = vpop.f32.mrf.mxu0
    %v2655 = vadd.f32 %v2576, %v2654
    %v2656 = vpop.f32.mrf.mxu0
    %2657 = vmatprep.mubr.bf16.mxu0 0
    %2658 = vmatmul.mubr.bf16.gmra.mxu0 %v2599
    %v2659 = vpop.f32.mrf.mxu0
    %v2660 = vadd.f32 %v2576, %v2659
    %v2661 = vpop.f32.mrf.mxu0
    %v2662 = vpop.f32.mrf.mxu0
    %v2663 = vadd.f32 %v2576, %v2662
    %v2664 = vpop.f32.mrf.mxu0
    %2665 = vdwg.mxu0
    %v2666 = vadd.f32 %v2636, %v1659
    %v2667 = vadd.f32 %v2639, %v1660
    %v2668 = vadd.f32 %v2644, %v1661
    %v2669 = vadd.f32 %v2647, %v1662
    %v2670 = vadd.f32 %v2652, %v1663
    %v2671 = vadd.f32 %v2655, %v1664
    %v2672 = vadd.f32 %v2660, %v1665
    %v2673 = vadd.f32 %v2663, %v1666
    %v2674 = vmul.f32 %v2666, %v1582
    %v2675 = vmul.f32 %v2667, %v1587
    %v2676 = vmul.f32 %v2668, %v1592
    %v2677 = vmul.f32 %v2669, %v1597
    %v2678 = vmul.f32 %v2670, %v1602
    %v2679 = vmul.f32 %v2671, %v1607
    %v2680 = vmul.f32 %v2672, %v1612
    %v2681 = vmul.f32 %v2673, %v1617
    %2682 = vst.msk [vmem:[%s8] sm:$0xff] %vm323, %v2674
    %2683 = vst.msk [vmem:[%s8 + $0x8] sm:$0xff] %vm323, %v2675
    %2684 = vst.msk [vmem:[%s8 + $0x10] sm:$0xff] %vm323, %v2676
    %2685 = vst.msk [vmem:[%s8 + $0x18] sm:$0xff] %vm323, %v2677
    %2686 = vst.msk [vmem:[%s8 + $0x20] sm:$0xff] %vm323, %v2678
    %2687 = vst.msk [vmem:[%s8 + $0x28] sm:$0xff] %vm323, %v2679
    %2688 = vst.msk [vmem:[%s8 + $0x30] sm:$0xff] %vm323, %v2680
    %2689 = vst.msk [vmem:[%s8 + $0x38] sm:$0xff] %vm323, %v2681
    // Predicated region
    $region42: #{tpu_custom_call.1} parent=1 // pred_check
      _
    $region43: #{tpu_custom_call.1} parent=1 // pred_check_branch
      %2691 = sbr.rel (0) target = $region45
    $region44: #{tpu_custom_call.1} parent=1 // pred_region
      _
    $region45: #{tpu_custom_call.1} parent=1 // pred_fallthru
      _
    // Predicated region
    $region46: #{tpu_custom_call.1} parent=1 // pred_check
      _
    $region47: #{tpu_custom_call.1} parent=1 // pred_check_branch
      %2693 = sbr.rel (0) target = $region49
    $region48: #{tpu_custom_call.1} parent=1 // pred_region
      _
    $region49: #{tpu_custom_call.1} parent=1 // pred_fallthru
      _
    %2694 = vsyncpa [#allocation3], 1
    %2695 = vsyncpa [#allocation5], 1

</llo_original>
